<compile_context>
chip_gen: v6e
topology: v6e:2x2x1
jax: 0.10.0
libtpu: 0.0.40
codegen_flags: <defaults>
</compile_context>

<pallas_src>
import jax
import jax.numpy as jnp
from jax.experimental import pallas as pl
from jax.experimental.pallas import tpu as pltpu

HIDDEN = 64
INPUT_SIZE = 1
OUTPUT_SIZE = 1
NUM_LAYERS = 2          # the fused-weight layout below hard-codes 2 layers
BATCH_TILE = 8          # sublane tile


def lstm_fc_kernel(x_ref, wpack_ref, binit_ref, bstep_ref, wfused_ref,
                   fcw_ref, fcb_ref, out_ref, add_ref):
    # x_ref:      (T, B, 1)     time-major input (one batch tile)
    # wpack_ref:  (1, 1, 8H)    layer-0 input weights at layer-0 positions, 0 at layer-1
    # binit_ref:  (1, 1, 8H)    [b0 | 0]  (phase-0 init; zero layer-1 keeps h1/c1 = 0)
    # bstep_ref:  (1, 1, 8H)    [b0 | b1] (per-step bias pack)
    # wfused_ref: (2H, 8H)      fused recurrent weights, gate blocks [i|f|o|g],
    #                           each block = [layer-0 gate (from h0) | layer-1 gate]
    # fcw_ref:    (1, 2H)       [0_H | fc.weight]   (acts on packed h = [h0|h1])
    # fcb_ref:    (1, 1)
    # out_ref:    (B, 1)
    # add_ref:    (T, B, 8H)    VMEM scratch holding [xproj_t | b1] for every t
    T, B, _ = x_ref.shape
    H2 = wfused_ref.shape[0]      # 2H = 128 (packed layer-0/layer-1 width)

    # Per-step additive slab add[t] = [x_t*Wih0 + b0 | b1], built with one VPU
    # broadcast multiply-add and parked in VMEM scratch.
    add_ref[...] = x_ref[...] * wpack_ref[...] + bstep_ref[...]

    def gates(z):
        # packed gate blocks [i0 i1 | f0 f1 | o0 o1 | g0 g1], each 128 lanes.
        # sigmoid via a single tanh EUP push per slab.
        sig = jnp.tanh(z[:, :3 * H2] * 0.5) * 0.5 + 0.5
        g = jnp.tanh(z[:, 3 * H2:])
        return sig[:, :H2], sig[:, H2:2 * H2], sig[:, 2 * H2:3 * H2], g

    # phase-0 packed pre-activation: layer-0 half = z0_0 = x_0*Wih0 + b0 (h0
    # starts at 0 so no dot); layer-1 half = 0 (tanh(0)=0 keeps c1/h1 exactly 0).
    z = x_ref[0] * wpack_ref[0] + binit_ref[0]            # (B, 8H)
    c = jnp.zeros((B, H2), jnp.float32)                    # packed [c0 | c1]
    h = jnp.zeros((B, H2), jnp.float32)                    # packed [h0 | h1]

    # Fully unrolled skewed recurrence.  At phase t the packed gate update
    # consumes z = [z0_t | z1_{t-1}] and produces h = [h0_t | h1_{t-1}]; one
    # fused dot then yields z = [z0_{t+1} | z1_t].
    for t in range(T):
        i, f, o, g = gates(z)
        c = f * c + i * g
        h = o * jnp.tanh(c)
        # last step: layer-0 half of the new z is never used, any finite add is fine
        nxt = add_ref[t + 1] if t + 1 < T else bstep_ref[0]
        z = (jnp.dot(h, wfused_ref[...], preferred_element_type=jnp.float32)
             + nxt)

    # final packed gate application -> h = [h0_T (unused) | h1_{T-1}]
    i, f, o, g = gates(z)
    c = f * c + i * g
    h = o * jnp.tanh(c)

    # fc on the h1 half via zero-padded fc weights: VPU mul + lane reduction.
    out_ref[...] = (jnp.sum(h * fcw_ref[...], axis=-1, keepdims=True)
                    + fcb_ref[...])


def _gate_chunks(a):
    """Split a PyTorch-gate-ordered array ([i, f, g, o] along axis 0) into
    per-gate chunks returned in the kernel's block order (i, f, o, g)."""
    H = HIDDEN
    return a[0:H], a[H:2 * H], a[3 * H:4 * H], a[2 * H:3 * H]


def _pack_params(params):
    """Pure weight-packing glue (run once per parameter set)."""
    (wih0, whh0, bih0, bhh0), (wih1, whh1, bih1, bhh1), (fcw, fcb) = params
    H = HIDDEN
    f32 = jnp.float32

    # fused recurrent weights: rows 0:H consume h0_t, rows H:2H consume h1_{t-1}
    r0 = _gate_chunks(whh0)     # layer-0 recurrent,        (H, H) each
    wi1 = _gate_chunks(wih1)    # layer-1 input (from h0),  (H, H) each
    r1 = _gate_chunks(whh1)     # layer-1 recurrent,        (H, H) each
    zhh = jnp.zeros((H, H), f32)

    def block(k):
        top = jnp.concatenate([r0[k].T, wi1[k].T], axis=1)   # (H, 2H)
        bot = jnp.concatenate([zhh, r1[k].T], axis=1)        # (H, 2H)
        return jnp.concatenate([top, bot], axis=0)           # (2H, 2H)

    wfused = jnp.concatenate([block(0), block(1), block(2), block(3)],
                             axis=1)                          # (2H, 8H)

    # layer-0 input weights / biases interleaved with zeros at layer-1 positions
    zh = jnp.zeros((H,), f32)
    wi0 = _gate_chunks(wih0[:, 0])                            # (H,) each
    wpack = jnp.concatenate([wi0[0], zh, wi0[1], zh,
                             wi0[2], zh, wi0[3], zh]).reshape(1, 1, 8 * H)

    b0 = _gate_chunks(bih0 + bhh0)
    b1 = _gate_chunks(bih1 + bhh1)
    binit = jnp.concatenate([b0[0], zh, b0[1], zh,
                             b0[2], zh, b0[3], zh]).reshape(1, 1, 8 * H)
    bstep = jnp.concatenate([b0[0], b1[0], b0[1], b1[1],
                             b0[2], b1[2], b0[3], b1[3]]).reshape(1, 1, 8 * H)

    fcw_pack = jnp.concatenate([jnp.zeros((1, H), f32), fcw.reshape(1, H)],
                               axis=1)                        # (1, 2H)
    fcb_pack = fcb.reshape(1, OUTPUT_SIZE)                    # (1, 1)
    return wpack, binit, bstep, wfused, fcw_pack, fcb_pack


def residual_forecaster_forward(x, params):
    """x: (B, T, I) float32, batch-first like nn.LSTM(batch_first=True)."""
    B, T, _ = x.shape
    H = HIDDEN
    bt = BATCH_TILE

    # pad the batch up to the sublane tile (zero rows are discarded at the end)
    Bp = ((B + bt - 1) // bt) * bt
    if Bp != B:
        x = jnp.pad(x, ((0, Bp - B), (0, 0), (0, 0)))
    x_tm = jnp.transpose(x, (1, 0, 2))                        # (T, Bp, I)

    wpack, binit, bstep, wfused, fcw_pack, fcb_pack = _pack_params(params)
    args = (x_tm, wpack, binit, bstep, wfused, fcw_pack, fcb_pack)

    out = pl.pallas_call(
        lstm_fc_kernel,
        out_shape=jax.ShapeDtypeStruct((Bp, OUTPUT_SIZE), jnp.float32),
        grid=(Bp // bt,),
        in_specs=[
            pl.BlockSpec((T, bt, INPUT_SIZE), lambda b: (0, b, 0)),
            pl.BlockSpec((1, 1, 8 * H), lambda b: (0, 0, 0)),
            pl.BlockSpec((1, 1, 8 * H), lambda b: (0, 0, 0)),
            pl.BlockSpec((1, 1, 8 * H), lambda b: (0, 0, 0)),
            pl.BlockSpec((2 * H, 8 * H), lambda b: (0, 0)),
            pl.BlockSpec((1, 2 * H), lambda b: (0, 0)),
            pl.BlockSpec((1, OUTPUT_SIZE), lambda b: (0, 0)),
        ],
        out_specs=pl.BlockSpec((bt, OUTPUT_SIZE), lambda b: (b, 0)),
        scratch_shapes=[pltpu.VMEM((T, bt, 8 * H), jnp.float32)],
        compiler_params=pltpu.CompilerParams(
            dimension_semantics=("parallel",)),
    )(*args)
    return out[:B]


def reference_forward(x, params):
    """Pure-JAX reference with PyTorch LSTM semantics (correctness check)."""
    (wih0, whh0, bih0, bhh0), (wih1, whh1, bih1, bhh1), (fcw, fcb) = params
    B, T, _ = x.shape
    H = HIDDEN
    hp = jax.lax.Precision.HIGHEST   # avoid bf16 matmul rounding in the reference

    def cell(xt, h, c, wih, whh, bih, bhh):
        z = (jnp.dot(xt, wih.T, precision=hp) + bih
             + jnp.dot(h, whh.T, precision=hp) + bhh)
        i = jax.nn.sigmoid(z[:, 0:H])
        f = jax.nn.sigmoid(z[:, H:2 * H])
        g = jnp.tanh(z[:, 2 * H:3 * H])
        o = jax.nn.sigmoid(z[:, 3 * H:4 * H])
        c_new = f * c + i * g
        return o * jnp.tanh(c_new), c_new

    h0 = c0 = h1 = c1 = jnp.zeros((B, H), jnp.float32)
    for t in range(T):
        h0, c0 = cell(x[:, t, :], h0, c0, wih0, whh0, bih0, bhh0)
        h1, c1 = cell(h0, h1, c1, wih1, whh1, bih1, bhh1)
    return jnp.dot(h1, fcw.T, precision=hp) + fcb


if __name__ == "__main__":
    B, T = 8, 8
    key = jax.random.PRNGKey(0)
    keys = jax.random.split(key, 11)

    k = 1.0 / (HIDDEN ** 0.5)  # PyTorch LSTM / Linear default uniform bound

    def u(kk, shape, bound):
        return jax.random.uniform(kk, shape, jnp.float32, -bound, bound)

    wih0 = u(keys[0], (4 * HIDDEN, INPUT_SIZE), k)
    whh0 = u(keys[1], (4 * HIDDEN, HIDDEN), k)
    bih0 = u(keys[2], (4 * HIDDEN,), k)
    bhh0 = u(keys[3], (4 * HIDDEN,), k)
    wih1 = u(keys[4], (4 * HIDDEN, HIDDEN), k)
    whh1 = u(keys[5], (4 * HIDDEN, HIDDEN), k)
    bih1 = u(keys[6], (4 * HIDDEN,), k)
    bhh1 = u(keys[7], (4 * HIDDEN,), k)
    fcw = u(keys[8], (OUTPUT_SIZE, HIDDEN), k)
    fcb = u(keys[9], (OUTPUT_SIZE,), k)

    x = jax.random.normal(keys[10], (B, T, INPUT_SIZE), jnp.float32)

    params = ((wih0, whh0, bih0, bhh0), (wih1, whh1, bih1, bhh1), (fcw, fcb))

    out = jax.block_until_ready(residual_forecaster_forward(x, params))
    ref = reference_forward(x, params)

    assert out.shape == (B, OUTPUT_SIZE), out.shape
    assert jnp.allclose(out, ref, atol=1e-5, rtol=1e-5), (out, ref)
    print("KERNEL_OK")
</pallas_src>

<mosaic_0001>
module attributes {stable_mosaic.version = 11 : i64} {
  func.func @lstm_fc_kernel(%arg0: i32, %arg1: memref<8x8x1xf32, #tpu.memory_space<vmem>>, %arg2: memref<1x1x512xf32, #tpu.memory_space<vmem>>, %arg3: memref<1x1x512xf32, #tpu.memory_space<vmem>>, %arg4: memref<1x1x512xf32, #tpu.memory_space<vmem>>, %arg5: memref<128x512xf32, #tpu.memory_space<vmem>>, %arg6: memref<1x128xf32, #tpu.memory_space<vmem>>, %arg7: memref<1x1xf32, #tpu.memory_space<vmem>>, %arg8: memref<8x1xf32, #tpu.memory_space<vmem>>, %arg9: memref<8x8x512xf32, #tpu.memory_space<vmem>>) attributes {dimension_semantics = [#tpu.dimension_semantics<parallel>], iteration_bounds = array<i64: 1>, scalar_prefetch = 0 : i64, scratch_operands = 1 : i64, tpu.core_type = #tpu.core_type<tc>, window_params = [{transform_indices = @transform_0, window_bounds = array<i64: 8, 8, 1>}, {pipeline_mode = #tpu.pipeline_mode<synchronous>, transform_indices = @transform_1, window_bounds = array<i64: 1, 1, 512>}, {pipeline_mode = #tpu.pipeline_mode<synchronous>, transform_indices = @transform_2, window_bounds = array<i64: 1, 1, 512>}, {pipeline_mode = #tpu.pipeline_mode<synchronous>, transform_indices = @transform_3, window_bounds = array<i64: 1, 1, 512>}, {pipeline_mode = #tpu.pipeline_mode<synchronous>, transform_indices = @transform_4, window_bounds = array<i64: 128, 512>}, {pipeline_mode = #tpu.pipeline_mode<synchronous>, transform_indices = @transform_5, window_bounds = array<i64: 1, 128>}, {pipeline_mode = #tpu.pipeline_mode<synchronous>, transform_indices = @transform_6, window_bounds = array<i64: 1, 1>}, {transform_indices = @transform_7, window_bounds = array<i64: 8, 1>}]} {
    %c0 = arith.constant 0 : index
    %c0_0 = arith.constant 0 : index
    %c0_1 = arith.constant 0 : index
    %0 = vector.load %arg1[%c0, %c0_0, %c0_1] : memref<8x8x1xf32, #tpu.memory_space<vmem>>, vector<8x8x1xf32>
    %c0_2 = arith.constant 0 : index
    %c0_3 = arith.constant 0 : index
    %c0_4 = arith.constant 0 : index
    %1 = vector.load %arg2[%c0_2, %c0_3, %c0_4] : memref<1x1x512xf32, #tpu.memory_space<vmem>>, vector<1x1x512xf32>
    %2 = vector.broadcast %0 : vector<8x8x1xf32> to vector<8x8x512xf32>
    %3 = vector.broadcast %1 : vector<1x1x512xf32> to vector<8x8x512xf32>
    %4 = arith.mulf %2, %3 : vector<8x8x512xf32>
    %c0_5 = arith.constant 0 : index
    %c0_6 = arith.constant 0 : index
    %c0_7 = arith.constant 0 : index
    %5 = vector.load %arg4[%c0_5, %c0_6, %c0_7] : memref<1x1x512xf32, #tpu.memory_space<vmem>>, vector<1x1x512xf32>
    %6 = vector.broadcast %5 : vector<1x1x512xf32> to vector<8x8x512xf32>
    %7 = arith.addf %4, %6 : vector<8x8x512xf32>
    %c0_8 = arith.constant 0 : index
    %c0_9 = arith.constant 0 : index
    %c0_10 = arith.constant 0 : index
    %8 = vector.load %arg9[%c0_8, %c0_9, %c0_10] : memref<8x8x512xf32, #tpu.memory_space<vmem>>, vector<8x8x512xf32>
    tpu.vector_store %arg9[%c0_8, %c0_9, %c0_10], %7 {strides = array<i32>} : memref<8x8x512xf32, #tpu.memory_space<vmem>>, vector<8x8x512xf32>,
    %c0_11 = arith.constant 0 : index
    %c0_12 = arith.constant 0 : index
    %c0_13 = arith.constant 0 : index
    %9 = vector.load %arg1[%c0_11, %c0_12, %c0_13] : memref<8x8x1xf32, #tpu.memory_space<vmem>>, vector<1x8x1xf32>
    %10 = vector.shape_cast %9 : vector<1x8x1xf32> to vector<8x1xf32>
    %c0_14 = arith.constant 0 : index
    %c0_15 = arith.constant 0 : index
    %c0_16 = arith.constant 0 : index
    %11 = vector.load %arg2[%c0_14, %c0_15, %c0_16] : memref<1x1x512xf32, #tpu.memory_space<vmem>>, vector<1x1x512xf32>
    %12 = vector.shape_cast %11 : vector<1x1x512xf32> to vector<1x512xf32>
    %13 = vector.broadcast %10 : vector<8x1xf32> to vector<8x512xf32>
    %14 = vector.broadcast %12 : vector<1x512xf32> to vector<8x512xf32>
    %15 = arith.mulf %13, %14 : vector<8x512xf32>
    %c0_17 = arith.constant 0 : index
    %c0_18 = arith.constant 0 : index
    %c0_19 = arith.constant 0 : index
    %16 = vector.load %arg3[%c0_17, %c0_18, %c0_19] : memref<1x1x512xf32, #tpu.memory_space<vmem>>, vector<1x1x512xf32>
    %17 = vector.shape_cast %16 : vector<1x1x512xf32> to vector<1x512xf32>
    %18 = vector.broadcast %17 : vector<1x512xf32> to vector<8x512xf32>
    %19 = arith.addf %15, %18 : vector<8x512xf32>
    %cst = arith.constant 0.000000e+00 : f32
    %20 = vector.broadcast %cst : f32 to vector<8x128xf32>
    %21 = vector.extract_strided_slice %19 {offsets = [0, 0], sizes = [8, 384], strides = [1, 1]} : vector<8x512xf32> to vector<8x384xf32>
    %cst_20 = arith.constant 5.000000e-01 : f32
    %22 = vector.broadcast %cst_20 : f32 to vector<8x384xf32>
    %23 = arith.mulf %21, %22 : vector<8x384xf32>
    %24 = math.tanh %23 : vector<8x384xf32>
    %cst_21 = arith.constant 5.000000e-01 : f32
    %25 = vector.broadcast %cst_21 : f32 to vector<8x384xf32>
    %26 = arith.mulf %24, %25 : vector<8x384xf32>
    %cst_22 = arith.constant 5.000000e-01 : f32
    %27 = vector.broadcast %cst_22 : f32 to vector<8x384xf32>
    %28 = arith.addf %26, %27 : vector<8x384xf32>
    %29 = vector.extract_strided_slice %19 {offsets = [0, 384], sizes = [8, 128], strides = [1, 1]} : vector<8x512xf32> to vector<8x128xf32>
    %30 = math.tanh %29 : vector<8x128xf32>
    %31 = vector.extract_strided_slice %28 {offsets = [0, 0], sizes = [8, 128], strides = [1, 1]} : vector<8x384xf32> to vector<8x128xf32>
    %32 = vector.extract_strided_slice %28 {offsets = [0, 128], sizes = [8, 128], strides = [1, 1]} : vector<8x384xf32> to vector<8x128xf32>
    %33 = vector.extract_strided_slice %28 {offsets = [0, 256], sizes = [8, 128], strides = [1, 1]} : vector<8x384xf32> to vector<8x128xf32>
    %34 = arith.mulf %32, %20 : vector<8x128xf32>
    %35 = arith.mulf %31, %30 : vector<8x128xf32>
    %36 = arith.addf %34, %35 : vector<8x128xf32>
    %37 = math.tanh %36 : vector<8x128xf32>
    %38 = arith.mulf %33, %37 : vector<8x128xf32>
    %c1 = arith.constant 1 : index
    %c0_23 = arith.constant 0 : index
    %c0_24 = arith.constant 0 : index
    %39 = vector.load %arg9[%c1, %c0_23, %c0_24] : memref<8x8x512xf32, #tpu.memory_space<vmem>>, vector<1x8x512xf32>
    %40 = vector.shape_cast %39 : vector<1x8x512xf32> to vector<8x512xf32>
    %c0_25 = arith.constant 0 : index
    %c0_26 = arith.constant 0 : index
    %41 = vector.load %arg5[%c0_25, %c0_26] : memref<128x512xf32, #tpu.memory_space<vmem>>, vector<128x512xf32>
    %cst_27 = arith.constant dense<0.000000e+00> : vector<8x512xf32>
    %42 = tpu.matmul %38, %41, %cst_27 {dimension_numbers = #tpu.dot_dimension_numbers<[1], [0], [0], [1], [0, 0, 1, 1], [], []>} : vector<8x128xf32>, vector<128x512xf32>, vector<8x512xf32> -> vector<8x512xf32>
    %43 = arith.addf %42, %40 : vector<8x512xf32>
    %44 = vector.extract_strided_slice %43 {offsets = [0, 0], sizes = [8, 384], strides = [1, 1]} : vector<8x512xf32> to vector<8x384xf32>
    %cst_28 = arith.constant 5.000000e-01 : f32
    %45 = vector.broadcast %cst_28 : f32 to vector<8x384xf32>
    %46 = arith.mulf %44, %45 : vector<8x384xf32>
    %47 = math.tanh %46 : vector<8x384xf32>
    %cst_29 = arith.constant 5.000000e-01 : f32
    %48 = vector.broadcast %cst_29 : f32 to vector<8x384xf32>
    %49 = arith.mulf %47, %48 : vector<8x384xf32>
    %cst_30 = arith.constant 5.000000e-01 : f32
    %50 = vector.broadcast %cst_30 : f32 to vector<8x384xf32>
    %51 = arith.addf %49, %50 : vector<8x384xf32>
    %52 = vector.extract_strided_slice %43 {offsets = [0, 384], sizes = [8, 128], strides = [1, 1]} : vector<8x512xf32> to vector<8x128xf32>
    %53 = math.tanh %52 : vector<8x128xf32>
    %54 = vector.extract_strided_slice %51 {offsets = [0, 0], sizes = [8, 128], strides = [1, 1]} : vector<8x384xf32> to vector<8x128xf32>
    %55 = vector.extract_strided_slice %51 {offsets = [0, 128], sizes = [8, 128], strides = [1, 1]} : vector<8x384xf32> to vector<8x128xf32>
    %56 = vector.extract_strided_slice %51 {offsets = [0, 256], sizes = [8, 128], strides = [1, 1]} : vector<8x384xf32> to vector<8x128xf32>
    %57 = arith.mulf %55, %36 : vector<8x128xf32>
    %58 = arith.mulf %54, %53 : vector<8x128xf32>
    %59 = arith.addf %57, %58 : vector<8x128xf32>
    %60 = math.tanh %59 : vector<8x128xf32>
    %61 = arith.mulf %56, %60 : vector<8x128xf32>
    %c2 = arith.constant 2 : index
    %c0_31 = arith.constant 0 : index
    %c0_32 = arith.constant 0 : index
    %62 = vector.load %arg9[%c2, %c0_31, %c0_32] : memref<8x8x512xf32, #tpu.memory_space<vmem>>, vector<1x8x512xf32>
    %63 = vector.shape_cast %62 : vector<1x8x512xf32> to vector<8x512xf32>
    %c0_33 = arith.constant 0 : index
    %c0_34 = arith.constant 0 : index
    %64 = vector.load %arg5[%c0_33, %c0_34] : memref<128x512xf32, #tpu.memory_space<vmem>>, vector<128x512xf32>
    %cst_35 = arith.constant dense<0.000000e+00> : vector<8x512xf32>
    %65 = tpu.matmul %61, %64, %cst_35 {dimension_numbers = #tpu.dot_dimension_numbers<[1], [0], [0], [1], [0, 0, 1, 1], [], []>} : vector<8x128xf32>, vector<128x512xf32>, vector<8x512xf32> -> vector<8x512xf32>
    %66 = arith.addf %65, %63 : vector<8x512xf32>
    %67 = vector.extract_strided_slice %66 {offsets = [0, 0], sizes = [8, 384], strides = [1, 1]} : vector<8x512xf32> to vector<8x384xf32>
    %cst_36 = arith.constant 5.000000e-01 : f32
    %68 = vector.broadcast %cst_36 : f32 to vector<8x384xf32>
    %69 = arith.mulf %67, %68 : vector<8x384xf32>
    %70 = math.tanh %69 : vector<8x384xf32>
    %cst_37 = arith.constant 5.000000e-01 : f32
    %71 = vector.broadcast %cst_37 : f32 to vector<8x384xf32>
    %72 = arith.mulf %70, %71 : vector<8x384xf32>
    %cst_38 = arith.constant 5.000000e-01 : f32
    %73 = vector.broadcast %cst_38 : f32 to vector<8x384xf32>
    %74 = arith.addf %72, %73 : vector<8x384xf32>
    %75 = vector.extract_strided_slice %66 {offsets = [0, 384], sizes = [8, 128], strides = [1, 1]} : vector<8x512xf32> to vector<8x128xf32>
    %76 = math.tanh %75 : vector<8x128xf32>
    %77 = vector.extract_strided_slice %74 {offsets = [0, 0], sizes = [8, 128], strides = [1, 1]} : vector<8x384xf32> to vector<8x128xf32>
    %78 = vector.extract_strided_slice %74 {offsets = [0, 128], sizes = [8, 128], strides = [1, 1]} : vector<8x384xf32> to vector<8x128xf32>
    %79 = vector.extract_strided_slice %74 {offsets = [0, 256], sizes = [8, 128], strides = [1, 1]} : vector<8x384xf32> to vector<8x128xf32>
    %80 = arith.mulf %78, %59 : vector<8x128xf32>
    %81 = arith.mulf %77, %76 : vector<8x128xf32>
    %82 = arith.addf %80, %81 : vector<8x128xf32>
    %83 = math.tanh %82 : vector<8x128xf32>
    %84 = arith.mulf %79, %83 : vector<8x128xf32>
    %c3 = arith.constant 3 : index
    %c0_39 = arith.constant 0 : index
    %c0_40 = arith.constant 0 : index
    %85 = vector.load %arg9[%c3, %c0_39, %c0_40] : memref<8x8x512xf32, #tpu.memory_space<vmem>>, vector<1x8x512xf32>
    %86 = vector.shape_cast %85 : vector<1x8x512xf32> to vector<8x512xf32>
    %c0_41 = arith.constant 0 : index
    %c0_42 = arith.constant 0 : index
    %87 = vector.load %arg5[%c0_41, %c0_42] : memref<128x512xf32, #tpu.memory_space<vmem>>, vector<128x512xf32>
    %cst_43 = arith.constant dense<0.000000e+00> : vector<8x512xf32>
    %88 = tpu.matmul %84, %87, %cst_43 {dimension_numbers = #tpu.dot_dimension_numbers<[1], [0], [0], [1], [0, 0, 1, 1], [], []>} : vector<8x128xf32>, vector<128x512xf32>, vector<8x512xf32> -> vector<8x512xf32>
    %89 = arith.addf %88, %86 : vector<8x512xf32>
    %90 = vector.extract_strided_slice %89 {offsets = [0, 0], sizes = [8, 384], strides = [1, 1]} : vector<8x512xf32> to vector<8x384xf32>
    %cst_44 = arith.constant 5.000000e-01 : f32
    %91 = vector.broadcast %cst_44 : f32 to vector<8x384xf32>
    %92 = arith.mulf %90, %91 : vector<8x384xf32>
    %93 = math.tanh %92 : vector<8x384xf32>
    %cst_45 = arith.constant 5.000000e-01 : f32
    %94 = vector.broadcast %cst_45 : f32 to vector<8x384xf32>
    %95 = arith.mulf %93, %94 : vector<8x384xf32>
    %cst_46 = arith.constant 5.000000e-01 : f32
    %96 = vector.broadcast %cst_46 : f32 to vector<8x384xf32>
    %97 = arith.addf %95, %96 : vector<8x384xf32>
    %98 = vector.extract_strided_slice %89 {offsets = [0, 384], sizes = [8, 128], strides = [1, 1]} : vector<8x512xf32> to vector<8x128xf32>
    %99 = math.tanh %98 : vector<8x128xf32>
    %100 = vector.extract_strided_slice %97 {offsets = [0, 0], sizes = [8, 128], strides = [1, 1]} : vector<8x384xf32> to vector<8x128xf32>
    %101 = vector.extract_strided_slice %97 {offsets = [0, 128], sizes = [8, 128], strides = [1, 1]} : vector<8x384xf32> to vector<8x128xf32>
    %102 = vector.extract_strided_slice %97 {offsets = [0, 256], sizes = [8, 128], strides = [1, 1]} : vector<8x384xf32> to vector<8x128xf32>
    %103 = arith.mulf %101, %82 : vector<8x128xf32>
    %104 = arith.mulf %100, %99 : vector<8x128xf32>
    %105 = arith.addf %103, %104 : vector<8x128xf32>
    %106 = math.tanh %105 : vector<8x128xf32>
    %107 = arith.mulf %102, %106 : vector<8x128xf32>
    %c4 = arith.constant 4 : index
    %c0_47 = arith.constant 0 : index
    %c0_48 = arith.constant 0 : index
    %108 = vector.load %arg9[%c4, %c0_47, %c0_48] : memref<8x8x512xf32, #tpu.memory_space<vmem>>, vector<1x8x512xf32>
    %109 = vector.shape_cast %108 : vector<1x8x512xf32> to vector<8x512xf32>
    %c0_49 = arith.constant 0 : index
    %c0_50 = arith.constant 0 : index
    %110 = vector.load %arg5[%c0_49, %c0_50] : memref<128x512xf32, #tpu.memory_space<vmem>>, vector<128x512xf32>
    %cst_51 = arith.constant dense<0.000000e+00> : vector<8x512xf32>
    %111 = tpu.matmul %107, %110, %cst_51 {dimension_numbers = #tpu.dot_dimension_numbers<[1], [0], [0], [1], [0, 0, 1, 1], [], []>} : vector<8x128xf32>, vector<128x512xf32>, vector<8x512xf32> -> vector<8x512xf32>
    %112 = arith.addf %111, %109 : vector<8x512xf32>
    %113 = vector.extract_strided_slice %112 {offsets = [0, 0], sizes = [8, 384], strides = [1, 1]} : vector<8x512xf32> to vector<8x384xf32>
    %cst_52 = arith.constant 5.000000e-01 : f32
    %114 = vector.broadcast %cst_52 : f32 to vector<8x384xf32>
    %115 = arith.mulf %113, %114 : vector<8x384xf32>
    %116 = math.tanh %115 : vector<8x384xf32>
    %cst_53 = arith.constant 5.000000e-01 : f32
    %117 = vector.broadcast %cst_53 : f32 to vector<8x384xf32>
    %118 = arith.mulf %116, %117 : vector<8x384xf32>
    %cst_54 = arith.constant 5.000000e-01 : f32
    %119 = vector.broadcast %cst_54 : f32 to vector<8x384xf32>
    %120 = arith.addf %118, %119 : vector<8x384xf32>
    %121 = vector.extract_strided_slice %112 {offsets = [0, 384], sizes = [8, 128], strides = [1, 1]} : vector<8x512xf32> to vector<8x128xf32>
    %122 = math.tanh %121 : vector<8x128xf32>
    %123 = vector.extract_strided_slice %120 {offsets = [0, 0], sizes = [8, 128], strides = [1, 1]} : vector<8x384xf32> to vector<8x128xf32>
    %124 = vector.extract_strided_slice %120 {offsets = [0, 128], sizes = [8, 128], strides = [1, 1]} : vector<8x384xf32> to vector<8x128xf32>
    %125 = vector.extract_strided_slice %120 {offsets = [0, 256], sizes = [8, 128], strides = [1, 1]} : vector<8x384xf32> to vector<8x128xf32>
    %126 = arith.mulf %124, %105 : vector<8x128xf32>
    %127 = arith.mulf %123, %122 : vector<8x128xf32>
    %128 = arith.addf %126, %127 : vector<8x128xf32>
    %129 = math.tanh %128 : vector<8x128xf32>
    %130 = arith.mulf %125, %129 : vector<8x128xf32>
    %c5 = arith.constant 5 : index
    %c0_55 = arith.constant 0 : index
    %c0_56 = arith.constant 0 : index
    %131 = vector.load %arg9[%c5, %c0_55, %c0_56] : memref<8x8x512xf32, #tpu.memory_space<vmem>>, vector<1x8x512xf32>
    %132 = vector.shape_cast %131 : vector<1x8x512xf32> to vector<8x512xf32>
    %c0_57 = arith.constant 0 : index
    %c0_58 = arith.constant 0 : index
    %133 = vector.load %arg5[%c0_57, %c0_58] : memref<128x512xf32, #tpu.memory_space<vmem>>, vector<128x512xf32>
    %cst_59 = arith.constant dense<0.000000e+00> : vector<8x512xf32>
    %134 = tpu.matmul %130, %133, %cst_59 {dimension_numbers = #tpu.dot_dimension_numbers<[1], [0], [0], [1], [0, 0, 1, 1], [], []>} : vector<8x128xf32>, vector<128x512xf32>, vector<8x512xf32> -> vector<8x512xf32>
    %135 = arith.addf %134, %132 : vector<8x512xf32>
    %136 = vector.extract_strided_slice %135 {offsets = [0, 0], sizes = [8, 384], strides = [1, 1]} : vector<8x512xf32> to vector<8x384xf32>
    %cst_60 = arith.constant 5.000000e-01 : f32
    %137 = vector.broadcast %cst_60 : f32 to vector<8x384xf32>
    %138 = arith.mulf %136, %137 : vector<8x384xf32>
    %139 = math.tanh %138 : vector<8x384xf32>
    %cst_61 = arith.constant 5.000000e-01 : f32
    %140 = vector.broadcast %cst_61 : f32 to vector<8x384xf32>
    %141 = arith.mulf %139, %140 : vector<8x384xf32>
    %cst_62 = arith.constant 5.000000e-01 : f32
    %142 = vector.broadcast %cst_62 : f32 to vector<8x384xf32>
    %143 = arith.addf %141, %142 : vector<8x384xf32>
    %144 = vector.extract_strided_slice %135 {offsets = [0, 384], sizes = [8, 128], strides = [1, 1]} : vector<8x512xf32> to vector<8x128xf32>
    %145 = math.tanh %144 : vector<8x128xf32>
    %146 = vector.extract_strided_slice %143 {offsets = [0, 0], sizes = [8, 128], strides = [1, 1]} : vector<8x384xf32> to vector<8x128xf32>
    %147 = vector.extract_strided_slice %143 {offsets = [0, 128], sizes = [8, 128], strides = [1, 1]} : vector<8x384xf32> to vector<8x128xf32>
    %148 = vector.extract_strided_slice %143 {offsets = [0, 256], sizes = [8, 128], strides = [1, 1]} : vector<8x384xf32> to vector<8x128xf32>
    %149 = arith.mulf %147, %128 : vector<8x128xf32>
    %150 = arith.mulf %146, %145 : vector<8x128xf32>
    %151 = arith.addf %149, %150 : vector<8x128xf32>
    %152 = math.tanh %151 : vector<8x128xf32>
    %153 = arith.mulf %148, %152 : vector<8x128xf32>
    %c6 = arith.constant 6 : index
    %c0_63 = arith.constant 0 : index
    %c0_64 = arith.constant 0 : index
    %154 = vector.load %arg9[%c6, %c0_63, %c0_64] : memref<8x8x512xf32, #tpu.memory_space<vmem>>, vector<1x8x512xf32>
    %155 = vector.shape_cast %154 : vector<1x8x512xf32> to vector<8x512xf32>
    %c0_65 = arith.constant 0 : index
    %c0_66 = arith.constant 0 : index
    %156 = vector.load %arg5[%c0_65, %c0_66] : memref<128x512xf32, #tpu.memory_space<vmem>>, vector<128x512xf32>
    %cst_67 = arith.constant dense<0.000000e+00> : vector<8x512xf32>
    %157 = tpu.matmul %153, %156, %cst_67 {dimension_numbers = #tpu.dot_dimension_numbers<[1], [0], [0], [1], [0, 0, 1, 1], [], []>} : vector<8x128xf32>, vector<128x512xf32>, vector<8x512xf32> -> vector<8x512xf32>
    %158 = arith.addf %157, %155 : vector<8x512xf32>
    %159 = vector.extract_strided_slice %158 {offsets = [0, 0], sizes = [8, 384], strides = [1, 1]} : vector<8x512xf32> to vector<8x384xf32>
    %cst_68 = arith.constant 5.000000e-01 : f32
    %160 = vector.broadcast %cst_68 : f32 to vector<8x384xf32>
    %161 = arith.mulf %159, %160 : vector<8x384xf32>
    %162 = math.tanh %161 : vector<8x384xf32>
    %cst_69 = arith.constant 5.000000e-01 : f32
    %163 = vector.broadcast %cst_69 : f32 to vector<8x384xf32>
    %164 = arith.mulf %162, %163 : vector<8x384xf32>
    %cst_70 = arith.constant 5.000000e-01 : f32
    %165 = vector.broadcast %cst_70 : f32 to vector<8x384xf32>
    %166 = arith.addf %164, %165 : vector<8x384xf32>
    %167 = vector.extract_strided_slice %158 {offsets = [0, 384], sizes = [8, 128], strides = [1, 1]} : vector<8x512xf32> to vector<8x128xf32>
    %168 = math.tanh %167 : vector<8x128xf32>
    %169 = vector.extract_strided_slice %166 {offsets = [0, 0], sizes = [8, 128], strides = [1, 1]} : vector<8x384xf32> to vector<8x128xf32>
    %170 = vector.extract_strided_slice %166 {offsets = [0, 128], sizes = [8, 128], strides = [1, 1]} : vector<8x384xf32> to vector<8x128xf32>
    %171 = vector.extract_strided_slice %166 {offsets = [0, 256], sizes = [8, 128], strides = [1, 1]} : vector<8x384xf32> to vector<8x128xf32>
    %172 = arith.mulf %170, %151 : vector<8x128xf32>
    %173 = arith.mulf %169, %168 : vector<8x128xf32>
    %174 = arith.addf %172, %173 : vector<8x128xf32>
    %175 = math.tanh %174 : vector<8x128xf32>
    %176 = arith.mulf %171, %175 : vector<8x128xf32>
    %c7 = arith.constant 7 : index
    %c0_71 = arith.constant 0 : index
    %c0_72 = arith.constant 0 : index
    %177 = vector.load %arg9[%c7, %c0_71, %c0_72] : memref<8x8x512xf32, #tpu.memory_space<vmem>>, vector<1x8x512xf32>
    %178 = vector.shape_cast %177 : vector<1x8x512xf32> to vector<8x512xf32>
    %c0_73 = arith.constant 0 : index
    %c0_74 = arith.constant 0 : index
    %179 = vector.load %arg5[%c0_73, %c0_74] : memref<128x512xf32, #tpu.memory_space<vmem>>, vector<128x512xf32>
    %cst_75 = arith.constant dense<0.000000e+00> : vector<8x512xf32>
    %180 = tpu.matmul %176, %179, %cst_75 {dimension_numbers = #tpu.dot_dimension_numbers<[1], [0], [0], [1], [0, 0, 1, 1], [], []>} : vector<8x128xf32>, vector<128x512xf32>, vector<8x512xf32> -> vector<8x512xf32>
    %181 = arith.addf %180, %178 : vector<8x512xf32>
    %182 = vector.extract_strided_slice %181 {offsets = [0, 0], sizes = [8, 384], strides = [1, 1]} : vector<8x512xf32> to vector<8x384xf32>
    %cst_76 = arith.constant 5.000000e-01 : f32
    %183 = vector.broadcast %cst_76 : f32 to vector<8x384xf32>
    %184 = arith.mulf %182, %183 : vector<8x384xf32>
    %185 = math.tanh %184 : vector<8x384xf32>
    %cst_77 = arith.constant 5.000000e-01 : f32
    %186 = vector.broadcast %cst_77 : f32 to vector<8x384xf32>
    %187 = arith.mulf %185, %186 : vector<8x384xf32>
    %cst_78 = arith.constant 5.000000e-01 : f32
    %188 = vector.broadcast %cst_78 : f32 to vector<8x384xf32>
    %189 = arith.addf %187, %188 : vector<8x384xf32>
    %190 = vector.extract_strided_slice %181 {offsets = [0, 384], sizes = [8, 128], strides = [1, 1]} : vector<8x512xf32> to vector<8x128xf32>
    %191 = math.tanh %190 : vector<8x128xf32>
    %192 = vector.extract_strided_slice %189 {offsets = [0, 0], sizes = [8, 128], strides = [1, 1]} : vector<8x384xf32> to vector<8x128xf32>
    %193 = vector.extract_strided_slice %189 {offsets = [0, 128], sizes = [8, 128], strides = [1, 1]} : vector<8x384xf32> to vector<8x128xf32>
    %194 = vector.extract_strided_slice %189 {offsets = [0, 256], sizes = [8, 128], strides = [1, 1]} : vector<8x384xf32> to vector<8x128xf32>
    %195 = arith.mulf %193, %174 : vector<8x128xf32>
    %196 = arith.mulf %192, %191 : vector<8x128xf32>
    %197 = arith.addf %195, %196 : vector<8x128xf32>
    %198 = math.tanh %197 : vector<8x128xf32>
    %199 = arith.mulf %194, %198 : vector<8x128xf32>
    %c0_79 = arith.constant 0 : index
    %c0_80 = arith.constant 0 : index
    %c0_81 = arith.constant 0 : index
    %200 = vector.load %arg4[%c0_79, %c0_80, %c0_81] : memref<1x1x512xf32, #tpu.memory_space<vmem>>, vector<1x1x512xf32>
    %201 = vector.shape_cast %200 : vector<1x1x512xf32> to vector<1x512xf32>
    %c0_82 = arith.constant 0 : index
    %c0_83 = arith.constant 0 : index
    %202 = vector.load %arg5[%c0_82, %c0_83] : memref<128x512xf32, #tpu.memory_space<vmem>>, vector<128x512xf32>
    %cst_84 = arith.constant dense<0.000000e+00> : vector<8x512xf32>
    %203 = tpu.matmul %199, %202, %cst_84 {dimension_numbers = #tpu.dot_dimension_numbers<[1], [0], [0], [1], [0, 0, 1, 1], [], []>} : vector<8x128xf32>, vector<128x512xf32>, vector<8x512xf32> -> vector<8x512xf32>
    %204 = vector.broadcast %201 : vector<1x512xf32> to vector<8x512xf32>
    %205 = arith.addf %203, %204 : vector<8x512xf32>
    %206 = vector.extract_strided_slice %205 {offsets = [0, 0], sizes = [8, 384], strides = [1, 1]} : vector<8x512xf32> to vector<8x384xf32>
    %cst_85 = arith.constant 5.000000e-01 : f32
    %207 = vector.broadcast %cst_85 : f32 to vector<8x384xf32>
    %208 = arith.mulf %206, %207 : vector<8x384xf32>
    %209 = math.tanh %208 : vector<8x384xf32>
    %cst_86 = arith.constant 5.000000e-01 : f32
    %210 = vector.broadcast %cst_86 : f32 to vector<8x384xf32>
    %211 = arith.mulf %209, %210 : vector<8x384xf32>
    %cst_87 = arith.constant 5.000000e-01 : f32
    %212 = vector.broadcast %cst_87 : f32 to vector<8x384xf32>
    %213 = arith.addf %211, %212 : vector<8x384xf32>
    %214 = vector.extract_strided_slice %205 {offsets = [0, 384], sizes = [8, 128], strides = [1, 1]} : vector<8x512xf32> to vector<8x128xf32>
    %215 = math.tanh %214 : vector<8x128xf32>
    %216 = vector.extract_strided_slice %213 {offsets = [0, 0], sizes = [8, 128], strides = [1, 1]} : vector<8x384xf32> to vector<8x128xf32>
    %217 = vector.extract_strided_slice %213 {offsets = [0, 128], sizes = [8, 128], strides = [1, 1]} : vector<8x384xf32> to vector<8x128xf32>
    %218 = vector.extract_strided_slice %213 {offsets = [0, 256], sizes = [8, 128], strides = [1, 1]} : vector<8x384xf32> to vector<8x128xf32>
    %219 = arith.mulf %217, %197 : vector<8x128xf32>
    %220 = arith.mulf %216, %215 : vector<8x128xf32>
    %221 = arith.addf %219, %220 : vector<8x128xf32>
    %222 = math.tanh %221 : vector<8x128xf32>
    %223 = arith.mulf %218, %222 : vector<8x128xf32>
    %c0_88 = arith.constant 0 : index
    %c0_89 = arith.constant 0 : index
    %224 = vector.load %arg6[%c0_88, %c0_89] : memref<1x128xf32, #tpu.memory_space<vmem>>, vector<1x128xf32>
    %225 = vector.broadcast %224 : vector<1x128xf32> to vector<8x128xf32>
    %226 = arith.mulf %223, %225 : vector<8x128xf32>
    %cst_90 = arith.constant dense<0.000000e+00> : vector<8xf32>
    %227 = vector.multi_reduction <add>, %226, %cst_90 [1] : vector<8x128xf32> to vector<8xf32>
    %228 = vector.shape_cast %227 : vector<8xf32> to vector<8x1xf32>
    %c0_91 = arith.constant 0 : index
    %c0_92 = arith.constant 0 : index
    %229 = vector.load %arg7[%c0_91, %c0_92] : memref<1x1xf32, #tpu.memory_space<vmem>>, vector<1x1xf32>
    %230 = vector.broadcast %229 : vector<1x1xf32> to vector<8x1xf32>
    %231 = arith.addf %228, %230 : vector<8x1xf32>
    %c0_93 = arith.constant 0 : index
    %c0_94 = arith.constant 0 : index
    %232 = vector.load %arg8[%c0_93, %c0_94] : memref<8x1xf32, #tpu.memory_space<vmem>>, vector<8x1xf32>
    tpu.vector_store %arg8[%c0_93, %c0_94], %231 {strides = array<i32>} : memref<8x1xf32, #tpu.memory_space<vmem>>, vector<8x1xf32>,
    return
  }
  func.func @transform_0(%arg0: i32) -> (i32, i32, i32) {
    %c0_i32 = arith.constant 0 : i32
    %c0_i32_0 = arith.constant 0 : i32
    %c0_i32_1 = arith.constant 0 : i32
    return %c0_i32, %arg0, %c0_i32_0 : i32, i32, i32
  }
  func.func @transform_1(%arg0: i32) -> (i32, i32, i32) {
    %c0_i32 = arith.constant 0 : i32
    %c0_i32_0 = arith.constant 0 : i32
    %c0_i32_1 = arith.constant 0 : i32
    %c0_i32_2 = arith.constant 0 : i32
    return %c0_i32, %c0_i32_0, %c0_i32_1 : i32, i32, i32
  }
  func.func @transform_2(%arg0: i32) -> (i32, i32, i32) {
    %c0_i32 = arith.constant 0 : i32
    %c0_i32_0 = arith.constant 0 : i32
    %c0_i32_1 = arith.constant 0 : i32
    %c0_i32_2 = arith.constant 0 : i32
    return %c0_i32, %c0_i32_0, %c0_i32_1 : i32, i32, i32
  }
  func.func @transform_3(%arg0: i32) -> (i32, i32, i32) {
    %c0_i32 = arith.constant 0 : i32
    %c0_i32_0 = arith.constant 0 : i32
    %c0_i32_1 = arith.constant 0 : i32
    %c0_i32_2 = arith.constant 0 : i32
    return %c0_i32, %c0_i32_0, %c0_i32_1 : i32, i32, i32
  }
  func.func @transform_4(%arg0: i32) -> (i32, i32) {
    %c0_i32 = arith.constant 0 : i32
    %c0_i32_0 = arith.constant 0 : i32
    %c0_i32_1 = arith.constant 0 : i32
    return %c0_i32, %c0_i32_0 : i32, i32
  }
  func.func @transform_5(%arg0: i32) -> (i32, i32) {
    %c0_i32 = arith.constant 0 : i32
    %c0_i32_0 = arith.constant 0 : i32
    %c0_i32_1 = arith.constant 0 : i32
    return %c0_i32, %c0_i32_0 : i32, i32
  }
  func.func @transform_6(%arg0: i32) -> (i32, i32) {
    %c0_i32 = arith.constant 0 : i32
    %c0_i32_0 = arith.constant 0 : i32
    %c0_i32_1 = arith.constant 0 : i32
    return %c0_i32, %c0_i32_0 : i32, i32
  }
  func.func @transform_7(%arg0: i32) -> (i32, i32) {
    %c0_i32 = arith.constant 0 : i32
    %c0_i32_0 = arith.constant 0 : i32
    return %arg0, %c0_i32 : i32, i32
  }
}

</mosaic_0001>

<llo_original>
// kernel: tpu_custom_call.1
$region0: #{tpu_custom_call.1}
  #allocation0 [shape = 'u32[]', space=smem, size = 0x4, offset = 0x4, fixed_abs, tag = 'smem constant byte address 0x4 - core index']
  #allocation1 [shape = 'u32[144,128]{1,0:T(1,128)}', space=vmem, size = 0x12000, scoped, tag = 'internal scratch']
  #allocation2 [shape = 'f32[8,8,512]{2,1,0:T(8,128)}', space=vmem, size = 0x20000, scoped, tag = 'scratch operand']
  #allocation3 [shape = 'f32[1,1]{1,0:T(1,128)S(1)}', space=vmem, size = 0x200, scoped, tag = 'scoped memory for tpu_custom_call.1']
  %s0 = inlined_call_operand.vmem [shape: f32[8,8,1], index: 0, kind: input, shape index: {}]
  %s1 = inlined_call_operand.vmem [shape: f32[1,1,512], index: 1, kind: input, shape index: {}]
  %s2 = inlined_call_operand.vmem [shape: f32[1,1,512], index: 2, kind: input, shape index: {}]
  %s3 = inlined_call_operand.vmem [shape: f32[1,1,512], index: 3, kind: input, shape index: {}]
  %s4 = inlined_call_operand.hbm [shape: f32[128,512], index: 4, kind: input, shape index: {}]
  %s5 = inlined_call_operand.vmem [shape: f32[1,128], index: 5, kind: input, shape index: {}]
  %s6 = inlined_call_operand.<no memory space> [shape: f32[1,1], index: 6, kind: input, shape index: {}]
  %s7 = inlined_call_operand.vmem [shape: f32[8,1], index: 7, kind: output, shape index: {}]
  %s8 = sld [smem:[#allocation0]]
  $region42: #{tpu_custom_call.1} parent=0
    _
  %s10 = ssub.s32 1, %s8
  %s11 = scalar_select 0, %s10, %s8
  %v12 = vstv %s6
  %13 = vst [vmem:[#allocation3] sm:$0x1] %v12
  $region1: #{tpu_custom_call.1} parent=0
    #allocation4 [shape = 'u8[262144]{0}', space=vmem, size = 0x40000, scoped, tag = 'input window, operand 4, single buffered']
    #allocation5 [shape = 's32[1]{0}', space=sflag, size = 0x4, scoped, tag = 'scoped memory for tpu_custom_call.1']
    %14 = vsyncpa [#allocation5], 0
    // Predicated region
    $region2: #{tpu_custom_call.1} parent=1 // pred_check
      _
    $region3: #{tpu_custom_call.1} parent=1 // pred_check_branch
      %16 = sbr.rel (0) target = $region5
    $region4: #{tpu_custom_call.1} parent=1 // pred_region
      _
    $region5: #{tpu_custom_call.1} parent=1 // pred_fallthru
      _
    // Predicated region
    $region6: #{tpu_custom_call.1} parent=1 // pred_check
      _
    $region7: #{tpu_custom_call.1} parent=1 // pred_check_branch
      %18 = sbr.rel (0) target = $region9
    $region8: #{tpu_custom_call.1} parent=1 // pred_region
      _
    $region9: #{tpu_custom_call.1} parent=1 // pred_fallthru
      _
    // Predicated region
    $region10: #{tpu_custom_call.1} parent=1 // pred_check
      _
    $region11: #{tpu_custom_call.1} parent=1 // pred_check_branch
      %20 = sbr.rel (0) target = $region13
    $region12: #{tpu_custom_call.1} parent=1 // pred_region
      _
    $region13: #{tpu_custom_call.1} parent=1 // pred_fallthru
      _
    // Predicated region
    $region14: #{tpu_custom_call.1} parent=1 // pred_check
      _
    $region15: #{tpu_custom_call.1} parent=1 // pred_check_branch
      %22 = sbr.rel (0) target = $region17
    $region16: #{tpu_custom_call.1} parent=1 // pred_region
      _
    $region17: #{tpu_custom_call.1} parent=1 // pred_fallthru
      _
    // Predicated region
    $region18: #{tpu_custom_call.1} parent=1 // pred_check
      _
    $region19: #{tpu_custom_call.1} parent=1 // pred_check_branch
      %24 = sbr.rel (0) target = $region21
    $region20: #{tpu_custom_call.1} parent=1 // pred_region
      %s26 = ssub.s32 8192, 8192
      %27 = vsyncadd [#allocation5], %s26
      %s28 = sshll.u32 [#allocation4], 4
      %s29 = int_to_ptr.vmem [resolvable:$true] %s28
      %34 = dma.hbm_to_vmem [thread:$0]  %s4, 8192, %s29, [#allocation5], 512, 512, 32
    $region21: #{tpu_custom_call.1} parent=1 // pred_fallthru
      _
    // Predicated region
    $region22: #{tpu_custom_call.1} parent=1 // pred_check
      _
    $region23: #{tpu_custom_call.1} parent=1 // pred_check_branch
      %36 = sbr.rel (0) target = $region25
    $region24: #{tpu_custom_call.1} parent=1 // pred_region
      _
    $region25: #{tpu_custom_call.1} parent=1 // pred_fallthru
      _
    // Predicated region
    $region26: #{tpu_custom_call.1} parent=1 // pred_check
      _
    $region27: #{tpu_custom_call.1} parent=1 // pred_check_branch
      %38 = sbr.rel (0) target = $region29
    $region28: #{tpu_custom_call.1} parent=1 // pred_region
      _
    $region29: #{tpu_custom_call.1} parent=1 // pred_fallthru
      _
    // Predicated region
    $region30: #{tpu_custom_call.1} parent=1 // pred_check
      _
    $region31: #{tpu_custom_call.1} parent=1 // pred_check_branch
      %40 = sbr.rel (0) target = $region33
    $region32: #{tpu_custom_call.1} parent=1 // pred_region
      %41 = dma.done [#allocation5], 8192
    $region33: #{tpu_custom_call.1} parent=1 // pred_fallthru
      _
    %v42 = vld [vmem:[%s0] sm:$0xff]
    %v43 = vld [vmem:[%s0 + $0x8] sm:$0xff]
    %v44 = vld [vmem:[%s0 + $0x10] sm:$0xff]
    %v45 = vld [vmem:[%s0 + $0x18] sm:$0xff]
    %v46 = vld [vmem:[%s0 + $0x20] sm:$0xff]
    %v47 = vld [vmem:[%s0 + $0x28] sm:$0xff]
    %v48 = vld [vmem:[%s0 + $0x30] sm:$0xff]
    %v49 = vld [vmem:[%s0 + $0x38] sm:$0xff]
    %v50 = vld [vmem:[%s1] sm:$0xf]
    %52 = vset.pattern.permute.xlu0 0
    %53 = vperm.xlu0 %52, %v42
    %v54 = vpop.permute.xlu0 %53
    %57 = vset.pattern.permute.xlu0 0
    %58 = vperm.xlu0 %57, %v43
    %v59 = vpop.permute.xlu0 %58
    %62 = vset.pattern.permute.xlu0 0
    %63 = vperm.xlu0 %62, %v44
    %v64 = vpop.permute.xlu0 %63
    %67 = vset.pattern.permute.xlu0 0
    %68 = vperm.xlu0 %67, %v45
    %v69 = vpop.permute.xlu0 %68
    %72 = vset.pattern.permute.xlu0 0
    %73 = vperm.xlu0 %72, %v46
    %v74 = vpop.permute.xlu0 %73
    %77 = vset.pattern.permute.xlu0 0
    %78 = vperm.xlu0 %77, %v47
    %v79 = vpop.permute.xlu0 %78
    %82 = vset.pattern.permute.xlu0 0
    %83 = vperm.xlu0 %82, %v48
    %v84 = vpop.permute.xlu0 %83
    %87 = vset.pattern.permute.xlu0 0
    %88 = vperm.xlu0 %87, %v49
    %v89 = vpop.permute.xlu0 %88
    %v92 = vlaneseq
    %v93 = vshrl.u32 %v92, 7
    %v94 = vsub.s32 0, %v93
    %v95 = vrot.slane %v50, %v94
    %v96 = vlaneseq
    %v97 = vshrl.u32 %v96, 7
    %v98 = vsub.s32 1, %v97
    %v99 = vrot.slane %v50, %v98
    %v100 = vlaneseq
    %v101 = vshrl.u32 %v100, 7
    %v102 = vsub.s32 2, %v101
    %v103 = vrot.slane %v50, %v102
    %v104 = vlaneseq
    %v105 = vshrl.u32 %v104, 7
    %v106 = vsub.s32 3, %v105
    %v107 = vrot.slane %v50, %v106
    %v112 = vmul.f32 %v54, %v95
    %v113 = vmul.f32 %v54, %v99
    %v114 = vmul.f32 %v54, %v103
    %v115 = vmul.f32 %v54, %v107
    %v116 = vmul.f32 %v59, %v95
    %v117 = vmul.f32 %v59, %v99
    %v118 = vmul.f32 %v59, %v103
    %v119 = vmul.f32 %v59, %v107
    %v120 = vmul.f32 %v64, %v95
    %v121 = vmul.f32 %v64, %v99
    %v122 = vmul.f32 %v64, %v103
    %v123 = vmul.f32 %v64, %v107
    %v124 = vmul.f32 %v69, %v95
    %v125 = vmul.f32 %v69, %v99
    %v126 = vmul.f32 %v69, %v103
    %v127 = vmul.f32 %v69, %v107
    %v128 = vmul.f32 %v74, %v95
    %v129 = vmul.f32 %v74, %v99
    %v130 = vmul.f32 %v74, %v103
    %v131 = vmul.f32 %v74, %v107
    %v132 = vmul.f32 %v79, %v95
    %v133 = vmul.f32 %v79, %v99
    %v134 = vmul.f32 %v79, %v103
    %v135 = vmul.f32 %v79, %v107
    %v136 = vmul.f32 %v84, %v95
    %v137 = vmul.f32 %v84, %v99
    %v138 = vmul.f32 %v84, %v103
    %v139 = vmul.f32 %v84, %v107
    %v140 = vmul.f32 %v89, %v95
    %v141 = vmul.f32 %v89, %v99
    %v142 = vmul.f32 %v89, %v103
    %v143 = vmul.f32 %v89, %v107
    %v144 = vld [vmem:[%s3] sm:$0xf]
    %v146 = vlaneseq
    %v147 = vshrl.u32 %v146, 7
    %v148 = vsub.s32 0, %v147
    %v149 = vrot.slane %v144, %v148
    %v150 = vlaneseq
    %v151 = vshrl.u32 %v150, 7
    %v152 = vsub.s32 1, %v151
    %v153 = vrot.slane %v144, %v152
    %v154 = vlaneseq
    %v155 = vshrl.u32 %v154, 7
    %v156 = vsub.s32 2, %v155
    %v157 = vrot.slane %v144, %v156
    %v158 = vlaneseq
    %v159 = vshrl.u32 %v158, 7
    %v160 = vsub.s32 3, %v159
    %v161 = vrot.slane %v144, %v160
    %v166 = vadd.f32 %v112, %v149
    %v167 = vadd.f32 %v113, %v153
    %v168 = vadd.f32 %v114, %v157
    %v169 = vadd.f32 %v115, %v161
    %v170 = vadd.f32 %v116, %v149
    %v171 = vadd.f32 %v117, %v153
    %v172 = vadd.f32 %v118, %v157
    %v173 = vadd.f32 %v119, %v161
    %v174 = vadd.f32 %v120, %v149
    %v175 = vadd.f32 %v121, %v153
    %v176 = vadd.f32 %v122, %v157
    %v177 = vadd.f32 %v123, %v161
    %v178 = vadd.f32 %v124, %v149
    %v179 = vadd.f32 %v125, %v153
    %v180 = vadd.f32 %v126, %v157
    %v181 = vadd.f32 %v127, %v161
    %v182 = vadd.f32 %v128, %v149
    %v183 = vadd.f32 %v129, %v153
    %v184 = vadd.f32 %v130, %v157
    %v185 = vadd.f32 %v131, %v161
    %v186 = vadd.f32 %v132, %v149
    %v187 = vadd.f32 %v133, %v153
    %v188 = vadd.f32 %v134, %v157
    %v189 = vadd.f32 %v135, %v161
    %v190 = vadd.f32 %v136, %v149
    %v191 = vadd.f32 %v137, %v153
    %v192 = vadd.f32 %v138, %v157
    %v193 = vadd.f32 %v139, %v161
    %v194 = vadd.f32 %v140, %v149
    %v195 = vadd.f32 %v141, %v153
    %v196 = vadd.f32 %v142, %v157
    %v197 = vadd.f32 %v143, %v161
    %198 = vst [vmem:[#allocation2] sm:$0xff] %v166
    %199 = vst [vmem:[#allocation2 + $0x8] sm:$0xff] %v167
    %200 = vst [vmem:[#allocation2 + $0x10] sm:$0xff] %v168
    %201 = vst [vmem:[#allocation2 + $0x18] sm:$0xff] %v169
    %202 = vst [vmem:[#allocation2 + $0x20] sm:$0xff] %v170
    %203 = vst [vmem:[#allocation2 + $0x28] sm:$0xff] %v171
    %204 = vst [vmem:[#allocation2 + $0x30] sm:$0xff] %v172
    %205 = vst [vmem:[#allocation2 + $0x38] sm:$0xff] %v173
    %206 = vst [vmem:[#allocation2 + $0x40] sm:$0xff] %v174
    %207 = vst [vmem:[#allocation2 + $0x48] sm:$0xff] %v175
    %208 = vst [vmem:[#allocation2 + $0x50] sm:$0xff] %v176
    %209 = vst [vmem:[#allocation2 + $0x58] sm:$0xff] %v177
    %210 = vst [vmem:[#allocation2 + $0x60] sm:$0xff] %v178
    %211 = vst [vmem:[#allocation2 + $0x68] sm:$0xff] %v179
    %212 = vst [vmem:[#allocation2 + $0x70] sm:$0xff] %v180
    %213 = vst [vmem:[#allocation2 + $0x78] sm:$0xff] %v181
    %214 = vst [vmem:[#allocation2 + $0x80] sm:$0xff] %v182
    %215 = vst [vmem:[#allocation2 + $0x88] sm:$0xff] %v183
    %216 = vst [vmem:[#allocation2 + $0x90] sm:$0xff] %v184
    %217 = vst [vmem:[#allocation2 + $0x98] sm:$0xff] %v185
    %218 = vst [vmem:[#allocation2 + $0xa0] sm:$0xff] %v186
    %219 = vst [vmem:[#allocation2 + $0xa8] sm:$0xff] %v187
    %220 = vst [vmem:[#allocation2 + $0xb0] sm:$0xff] %v188
    %221 = vst [vmem:[#allocation2 + $0xb8] sm:$0xff] %v189
    %222 = vst [vmem:[#allocation2 + $0xc0] sm:$0xff] %v190
    %223 = vst [vmem:[#allocation2 + $0xc8] sm:$0xff] %v191
    %224 = vst [vmem:[#allocation2 + $0xd0] sm:$0xff] %v192
    %225 = vst [vmem:[#allocation2 + $0xd8] sm:$0xff] %v193
    %226 = vst [vmem:[#allocation2 + $0xe0] sm:$0xff] %v194
    %227 = vst [vmem:[#allocation2 + $0xe8] sm:$0xff] %v195
    %228 = vst [vmem:[#allocation2 + $0xf0] sm:$0xff] %v196
    %229 = vst [vmem:[#allocation2 + $0xf8] sm:$0xff] %v197
    %v230 = vld [vmem:[%s0] sm:$0xff]
    %v231 = vld [vmem:[%s1] sm:$0xf]
    %233 = vset.pattern.permute.xlu0 0
    %234 = vperm.xlu0 %233, %v230
    %v235 = vpop.permute.xlu0 %234
    %v238 = vlaneseq
    %v239 = vshrl.u32 %v238, 7
    %v240 = vsub.s32 0, %v239
    %v241 = vrot.slane %v231, %v240
    %v242 = vlaneseq
    %v243 = vshrl.u32 %v242, 7
    %v244 = vsub.s32 1, %v243
    %v245 = vrot.slane %v231, %v244
    %v246 = vlaneseq
    %v247 = vshrl.u32 %v246, 7
    %v248 = vsub.s32 2, %v247
    %v249 = vrot.slane %v231, %v248
    %v250 = vlaneseq
    %v251 = vshrl.u32 %v250, 7
    %v252 = vsub.s32 3, %v251
    %v253 = vrot.slane %v231, %v252
    %v258 = vmul.f32 %v235, %v241
    %v259 = vmul.f32 %v235, %v245
    %v260 = vmul.f32 %v235, %v249
    %v261 = vmul.f32 %v235, %v253
    %v262 = vld [vmem:[%s2] sm:$0xf]
    %v264 = vlaneseq
    %v265 = vshrl.u32 %v264, 7
    %v266 = vsub.s32 0, %v265
    %v267 = vrot.slane %v262, %v266
    %v268 = vlaneseq
    %v269 = vshrl.u32 %v268, 7
    %v270 = vsub.s32 1, %v269
    %v271 = vrot.slane %v262, %v270
    %v272 = vlaneseq
    %v273 = vshrl.u32 %v272, 7
    %v274 = vsub.s32 2, %v273
    %v275 = vrot.slane %v262, %v274
    %v276 = vlaneseq
    %v277 = vshrl.u32 %v276, 7
    %v278 = vsub.s32 3, %v277
    %v279 = vrot.slane %v262, %v278
    %v284 = vadd.f32 %v258, %v267
    %v285 = vadd.f32 %v259, %v271
    %v286 = vadd.f32 %v260, %v275
    %v287 = vadd.f32 %v261, %v279
    %v288 = vmul.f32 %v284, 0.5
    %v289 = vmul.f32 %v285, 0.5
    %v290 = vmul.f32 %v286, 0.5
    %v291 = vtanh.pop %v288
    %v292 = vtanh.pop %v289
    %v293 = vtanh.pop %v290
    %v294 = vmul.f32 %v291, 0.5
    %v295 = vmul.f32 %v292, 0.5
    %v296 = vmul.f32 %v293, 0.5
    %v297 = vadd.f32 %v294, 0.5
    %v298 = vadd.f32 %v295, 0.5
    %v299 = vadd.f32 %v296, 0.5
    %v300 = vtanh.pop %v287
    %v301 = vmul.f32 %v298, 0.0
    %v302 = vmul.f32 %v297, %v300
    %v303 = vadd.f32 %v301, %v302
    %v304 = vtanh.pop %v303
    %v305 = vmul.f32 %v299, %v304
    %s306 = scalar_lea.vmem [#allocation2], 32
    %v307 = vld [vmem:[%s306] sm:$0xff]
    %v308 = vld [vmem:[%s306 + $0x8] sm:$0xff]
    %v309 = vld [vmem:[%s306 + $0x10] sm:$0xff]
    %v310 = vld [vmem:[%s306 + $0x18] sm:$0xff]
    %v311 = vld [vmem:[#allocation4] sm:$0xff]
    %v312 = vld [vmem:[#allocation4 + $0x8] sm:$0xff]
    %v313 = vld [vmem:[#allocation4 + $0x10] sm:$0xff]
    %v314 = vld [vmem:[#allocation4 + $0x18] sm:$0xff]
    %v315 = vld [vmem:[#allocation4 + $0x20] sm:$0xff]
    %v316 = vld [vmem:[#allocation4 + $0x28] sm:$0xff]
    %v317 = vld [vmem:[#allocation4 + $0x30] sm:$0xff]
    %v318 = vld [vmem:[#allocation4 + $0x38] sm:$0xff]
    %v319 = vld [vmem:[#allocation4 + $0x40] sm:$0xff]
    %v320 = vld [vmem:[#allocation4 + $0x48] sm:$0xff]
    %v321 = vld [vmem:[#allocation4 + $0x50] sm:$0xff]
    %v322 = vld [vmem:[#allocation4 + $0x58] sm:$0xff]
    %v323 = vld [vmem:[#allocation4 + $0x60] sm:$0xff]
    %v324 = vld [vmem:[#allocation4 + $0x68] sm:$0xff]
    %v325 = vld [vmem:[#allocation4 + $0x70] sm:$0xff]
    %v326 = vld [vmem:[#allocation4 + $0x78] sm:$0xff]
    %v327 = vld [vmem:[#allocation4 + $0x80] sm:$0xff]
    %v328 = vld [vmem:[#allocation4 + $0x88] sm:$0xff]
    %v329 = vld [vmem:[#allocation4 + $0x90] sm:$0xff]
    %v330 = vld [vmem:[#allocation4 + $0x98] sm:$0xff]
    %v331 = vld [vmem:[#allocation4 + $0xa0] sm:$0xff]
    %v332 = vld [vmem:[#allocation4 + $0xa8] sm:$0xff]
    %v333 = vld [vmem:[#allocation4 + $0xb0] sm:$0xff]
    %v334 = vld [vmem:[#allocation4 + $0xb8] sm:$0xff]
    %v335 = vld [vmem:[#allocation4 + $0xc0] sm:$0xff]
    %v336 = vld [vmem:[#allocation4 + $0xc8] sm:$0xff]
    %v337 = vld [vmem:[#allocation4 + $0xd0] sm:$0xff]
    %v338 = vld [vmem:[#allocation4 + $0xd8] sm:$0xff]
    %v339 = vld [vmem:[#allocation4 + $0xe0] sm:$0xff]
    %v340 = vld [vmem:[#allocation4 + $0xe8] sm:$0xff]
    %v341 = vld [vmem:[#allocation4 + $0xf0] sm:$0xff]
    %v342 = vld [vmem:[#allocation4 + $0xf8] sm:$0xff]
    %v343 = vld [vmem:[#allocation4 + $0x100] sm:$0xff]
    %v344 = vld [vmem:[#allocation4 + $0x108] sm:$0xff]
    %v345 = vld [vmem:[#allocation4 + $0x110] sm:$0xff]
    %v346 = vld [vmem:[#allocation4 + $0x118] sm:$0xff]
    %v347 = vld [vmem:[#allocation4 + $0x120] sm:$0xff]
    %v348 = vld [vmem:[#allocation4 + $0x128] sm:$0xff]
    %v349 = vld [vmem:[#allocation4 + $0x130] sm:$0xff]
    %v350 = vld [vmem:[#allocation4 + $0x138] sm:$0xff]
    %v351 = vld [vmem:[#allocation4 + $0x140] sm:$0xff]
    %v352 = vld [vmem:[#allocation4 + $0x148] sm:$0xff]
    %v353 = vld [vmem:[#allocation4 + $0x150] sm:$0xff]
    %v354 = vld [vmem:[#allocation4 + $0x158] sm:$0xff]
    %v355 = vld [vmem:[#allocation4 + $0x160] sm:$0xff]
    %v356 = vld [vmem:[#allocation4 + $0x168] sm:$0xff]
    %v357 = vld [vmem:[#allocation4 + $0x170] sm:$0xff]
    %v358 = vld [vmem:[#allocation4 + $0x178] sm:$0xff]
    %v359 = vld [vmem:[#allocation4 + $0x180] sm:$0xff]
    %v360 = vld [vmem:[#allocation4 + $0x188] sm:$0xff]
    %v361 = vld [vmem:[#allocation4 + $0x190] sm:$0xff]
    %v362 = vld [vmem:[#allocation4 + $0x198] sm:$0xff]
    %v363 = vld [vmem:[#allocation4 + $0x1a0] sm:$0xff]
    %v364 = vld [vmem:[#allocation4 + $0x1a8] sm:$0xff]
    %v365 = vld [vmem:[#allocation4 + $0x1b0] sm:$0xff]
    %v366 = vld [vmem:[#allocation4 + $0x1b8] sm:$0xff]
    %v367 = vld [vmem:[#allocation4 + $0x1c0] sm:$0xff]
    %v368 = vld [vmem:[#allocation4 + $0x1c8] sm:$0xff]
    %v369 = vld [vmem:[#allocation4 + $0x1d0] sm:$0xff]
    %v370 = vld [vmem:[#allocation4 + $0x1d8] sm:$0xff]
    %v371 = vld [vmem:[#allocation4 + $0x1e0] sm:$0xff]
    %v372 = vld [vmem:[#allocation4 + $0x1e8] sm:$0xff]
    %v373 = vld [vmem:[#allocation4 + $0x1f0] sm:$0xff]
    %v374 = vld [vmem:[#allocation4 + $0x1f8] sm:$0xff]
    %375 = vmatprep.subr.mxu0 %v372
    %376 = vmatpush1.msra.mxu0 %v371
    %377 = vmatprep.subr.mxu0 %v368
    %378 = vmatpush1.msra.mxu0 %v367
    %379 = vmatprep.subr.mxu0 %v364
    %380 = vmatpush1.msra.mxu0 %v363
    %381 = vmatprep.subr.mxu0 %v360
    %382 = vmatpush1.msra.mxu0 %v359
    %383 = vmatprep.subr.mxu0 %v356
    %384 = vmatpush1.msra.mxu0 %v355
    %385 = vmatprep.subr.mxu0 %v352
    %386 = vmatpush1.msra.mxu0 %v351
    %387 = vmatprep.subr.mxu0 %v348
    %388 = vmatpush1.msra.mxu0 %v347
    %389 = vmatprep.subr.mxu0 %v344
    %390 = vmatpush1.msra.mxu0 %v343
    %391 = vmatprep.subr.mxu0 %v340
    %392 = vmatpush1.msra.mxu0 %v339
    %393 = vmatprep.subr.mxu0 %v336
    %394 = vmatpush1.msra.mxu0 %v335
    %395 = vmatprep.subr.mxu0 %v332
    %396 = vmatpush1.msra.mxu0 %v331
    %397 = vmatprep.subr.mxu0 %v328
    %398 = vmatpush1.msra.mxu0 %v327
    %399 = vmatprep.subr.mxu0 %v324
    %400 = vmatpush1.msra.mxu0 %v323
    %401 = vmatprep.subr.mxu0 %v320
    %402 = vmatpush1.msra.mxu0 %v319
    %403 = vmatprep.subr.mxu0 %v316
    %404 = vmatpush1.msra.mxu0 %v315
    %405 = vmatprep.subr.mxu0 %v312
    %406 = vmatpush1.msra.mxu0 %v311
    %407 = vmatprep.subr.mxu0 0.0
    %408 = vmatpush2.msra.mxu0 0.0
    %409 = vmatprep.subr.mxu0 0.0
    %410 = vmatpush2.msra.mxu0 0.0
    %411 = vmatprep.subr.mxu0 0.0
    %412 = vmatpush2.msra.mxu0 0.0
    %413 = vmatprep.subr.mxu0 0.0
    %414 = vmatpush2.msra.mxu0 0.0
    %415 = vmatprep.subr.mxu0 0.0
    %416 = vmatpush2.msra.mxu0 0.0
    %417 = vmatprep.subr.mxu0 0.0
    %418 = vmatpush2.msra.mxu0 0.0
    %419 = vmatprep.subr.mxu0 0.0
    %420 = vmatpush2.msra.mxu0 0.0
    %421 = vmatprep.subr.mxu0 0.0
    %422 = vmatpush2.msra.mxu0 0.0
    %423 = vmatprep.subr.mxu0 0.0
    %424 = vmatpush2.msra.mxu0 0.0
    %425 = vmatprep.subr.mxu0 0.0
    %426 = vmatpush2.msra.mxu0 0.0
    %427 = vmatprep.subr.mxu0 0.0
    %428 = vmatpush2.msra.mxu0 0.0
    %429 = vmatprep.subr.mxu0 0.0
    %430 = vmatpush2.msra.mxu0 0.0
    %431 = vmatprep.subr.mxu0 0.0
    %432 = vmatpush2.msra.mxu0 0.0
    %433 = vmatprep.subr.mxu0 0.0
    %434 = vmatpush2.msra.mxu0 0.0
    %435 = vmatprep.subr.mxu0 0.0
    %436 = vmatpush2.msra.mxu0 0.0
    %437 = vmatprep.subr.mxu0 0.0
    %438 = vmatpush2.msra.mxu0 0.0
    %439 = vmatprep.mubr.f32.mxu0 0.0
    %440 = vmatmul.mubr.f32.gmra.mxu0 %v305
    %v441 = vpop.f32.mrf.mxu0
    %v442 = vadd.f32 %v307, %v441
    %v443 = vpop.f32.mrf.mxu0
    %v444 = vadd.f32 %v308, %v443
    %445 = vdwg.mxu0
    %446 = vmatprep.subr.mxu0 %v374
    %447 = vmatpush1.msra.mxu0 %v373
    %448 = vmatprep.subr.mxu0 %v370
    %449 = vmatpush1.msra.mxu0 %v369
    %450 = vmatprep.subr.mxu0 %v366
    %451 = vmatpush1.msra.mxu0 %v365
    %452 = vmatprep.subr.mxu0 %v362
    %453 = vmatpush1.msra.mxu0 %v361
    %454 = vmatprep.subr.mxu0 %v358
    %455 = vmatpush1.msra.mxu0 %v357
    %456 = vmatprep.subr.mxu0 %v354
    %457 = vmatpush1.msra.mxu0 %v353
    %458 = vmatprep.subr.mxu0 %v350
    %459 = vmatpush1.msra.mxu0 %v349
    %460 = vmatprep.subr.mxu0 %v346
    %461 = vmatpush1.msra.mxu0 %v345
    %462 = vmatprep.subr.mxu0 %v342
    %463 = vmatpush1.msra.mxu0 %v341
    %464 = vmatprep.subr.mxu0 %v338
    %465 = vmatpush1.msra.mxu0 %v337
    %466 = vmatprep.subr.mxu0 %v334
    %467 = vmatpush1.msra.mxu0 %v333
    %468 = vmatprep.subr.mxu0 %v330
    %469 = vmatpush1.msra.mxu0 %v329
    %470 = vmatprep.subr.mxu0 %v326
    %471 = vmatpush1.msra.mxu0 %v325
    %472 = vmatprep.subr.mxu0 %v322
    %473 = vmatpush1.msra.mxu0 %v321
    %474 = vmatprep.subr.mxu0 %v318
    %475 = vmatpush1.msra.mxu0 %v317
    %476 = vmatprep.subr.mxu0 %v314
    %477 = vmatpush1.msra.mxu0 %v313
    %478 = vmatprep.subr.mxu0 0.0
    %479 = vmatpush2.msra.mxu0 0.0
    %480 = vmatprep.subr.mxu0 0.0
    %481 = vmatpush2.msra.mxu0 0.0
    %482 = vmatprep.subr.mxu0 0.0
    %483 = vmatpush2.msra.mxu0 0.0
    %484 = vmatprep.subr.mxu0 0.0
    %485 = vmatpush2.msra.mxu0 0.0
    %486 = vmatprep.subr.mxu0 0.0
    %487 = vmatpush2.msra.mxu0 0.0
    %488 = vmatprep.subr.mxu0 0.0
    %489 = vmatpush2.msra.mxu0 0.0
    %490 = vmatprep.subr.mxu0 0.0
    %491 = vmatpush2.msra.mxu0 0.0
    %492 = vmatprep.subr.mxu0 0.0
    %493 = vmatpush2.msra.mxu0 0.0
    %494 = vmatprep.subr.mxu0 0.0
    %495 = vmatpush2.msra.mxu0 0.0
    %496 = vmatprep.subr.mxu0 0.0
    %497 = vmatpush2.msra.mxu0 0.0
    %498 = vmatprep.subr.mxu0 0.0
    %499 = vmatpush2.msra.mxu0 0.0
    %500 = vmatprep.subr.mxu0 0.0
    %501 = vmatpush2.msra.mxu0 0.0
    %502 = vmatprep.subr.mxu0 0.0
    %503 = vmatpush2.msra.mxu0 0.0
    %504 = vmatprep.subr.mxu0 0.0
    %505 = vmatpush2.msra.mxu0 0.0
    %506 = vmatprep.subr.mxu0 0.0
    %507 = vmatpush2.msra.mxu0 0.0
    %508 = vmatprep.subr.mxu0 0.0
    %509 = vmatpush2.msra.mxu0 0.0
    %510 = vmatprep.mubr.f32.mxu0 0.0
    %511 = vmatmul.mubr.f32.gmra.mxu0 %v305
    %v512 = vpop.f32.mrf.mxu0
    %v513 = vadd.f32 %v309, %v512
    %v514 = vpop.f32.mrf.mxu0
    %v515 = vadd.f32 %v310, %v514
    %516 = vdwg.mxu0
    %v517 = vmul.f32 %v442, 0.5
    %v518 = vmul.f32 %v444, 0.5
    %v519 = vmul.f32 %v513, 0.5
    %v520 = vtanh.pop %v517
    %v521 = vtanh.pop %v518
    %v522 = vtanh.pop %v519
    %v523 = vmul.f32 %v520, 0.5
    %v524 = vmul.f32 %v521, 0.5
    %v525 = vmul.f32 %v522, 0.5
    %v526 = vadd.f32 %v523, 0.5
    %v527 = vadd.f32 %v524, 0.5
    %v528 = vadd.f32 %v525, 0.5
    %v529 = vtanh.pop %v515
    %v530 = vmul.f32 %v527, %v303
    %v531 = vmul.f32 %v526, %v529
    %v532 = vadd.f32 %v530, %v531
    %v533 = vtanh.pop %v532
    %v534 = vmul.f32 %v528, %v533
    %s535 = scalar_lea.vmem [#allocation2], 64
    %v536 = vld [vmem:[%s535] sm:$0xff]
    %v537 = vld [vmem:[%s535 + $0x8] sm:$0xff]
    %v538 = vld [vmem:[%s535 + $0x10] sm:$0xff]
    %v539 = vld [vmem:[%s535 + $0x18] sm:$0xff]
    %540 = vmatprep.subr.mxu0 %v372
    %541 = vmatpush1.msra.mxu0 %v371
    %542 = vmatprep.subr.mxu0 %v368
    %543 = vmatpush1.msra.mxu0 %v367
    %544 = vmatprep.subr.mxu0 %v364
    %545 = vmatpush1.msra.mxu0 %v363
    %546 = vmatprep.subr.mxu0 %v360
    %547 = vmatpush1.msra.mxu0 %v359
    %548 = vmatprep.subr.mxu0 %v356
    %549 = vmatpush1.msra.mxu0 %v355
    %550 = vmatprep.subr.mxu0 %v352
    %551 = vmatpush1.msra.mxu0 %v351
    %552 = vmatprep.subr.mxu0 %v348
    %553 = vmatpush1.msra.mxu0 %v347
    %554 = vmatprep.subr.mxu0 %v344
    %555 = vmatpush1.msra.mxu0 %v343
    %556 = vmatprep.subr.mxu0 %v340
    %557 = vmatpush1.msra.mxu0 %v339
    %558 = vmatprep.subr.mxu0 %v336
    %559 = vmatpush1.msra.mxu0 %v335
    %560 = vmatprep.subr.mxu0 %v332
    %561 = vmatpush1.msra.mxu0 %v331
    %562 = vmatprep.subr.mxu0 %v328
    %563 = vmatpush1.msra.mxu0 %v327
    %564 = vmatprep.subr.mxu0 %v324
    %565 = vmatpush1.msra.mxu0 %v323
    %566 = vmatprep.subr.mxu0 %v320
    %567 = vmatpush1.msra.mxu0 %v319
    %568 = vmatprep.subr.mxu0 %v316
    %569 = vmatpush1.msra.mxu0 %v315
    %570 = vmatprep.subr.mxu0 %v312
    %571 = vmatpush1.msra.mxu0 %v311
    %572 = vmatprep.subr.mxu0 0.0
    %573 = vmatpush2.msra.mxu0 0.0
    %574 = vmatprep.subr.mxu0 0.0
    %575 = vmatpush2.msra.mxu0 0.0
    %576 = vmatprep.subr.mxu0 0.0
    %577 = vmatpush2.msra.mxu0 0.0
    %578 = vmatprep.subr.mxu0 0.0
    %579 = vmatpush2.msra.mxu0 0.0
    %580 = vmatprep.subr.mxu0 0.0
    %581 = vmatpush2.msra.mxu0 0.0
    %582 = vmatprep.subr.mxu0 0.0
    %583 = vmatpush2.msra.mxu0 0.0
    %584 = vmatprep.subr.mxu0 0.0
    %585 = vmatpush2.msra.mxu0 0.0
    %586 = vmatprep.subr.mxu0 0.0
    %587 = vmatpush2.msra.mxu0 0.0
    %588 = vmatprep.subr.mxu0 0.0
    %589 = vmatpush2.msra.mxu0 0.0
    %590 = vmatprep.subr.mxu0 0.0
    %591 = vmatpush2.msra.mxu0 0.0
    %592 = vmatprep.subr.mxu0 0.0
    %593 = vmatpush2.msra.mxu0 0.0
    %594 = vmatprep.subr.mxu0 0.0
    %595 = vmatpush2.msra.mxu0 0.0
    %596 = vmatprep.subr.mxu0 0.0
    %597 = vmatpush2.msra.mxu0 0.0
    %598 = vmatprep.subr.mxu0 0.0
    %599 = vmatpush2.msra.mxu0 0.0
    %600 = vmatprep.subr.mxu0 0.0
    %601 = vmatpush2.msra.mxu0 0.0
    %602 = vmatprep.subr.mxu0 0.0
    %603 = vmatpush2.msra.mxu0 0.0
    %604 = vmatprep.mubr.f32.mxu0 0.0
    %605 = vmatmul.mubr.f32.gmra.mxu0 %v534
    %v606 = vpop.f32.mrf.mxu0
    %v607 = vadd.f32 %v536, %v606
    %v608 = vpop.f32.mrf.mxu0
    %v609 = vadd.f32 %v537, %v608
    %610 = vdwg.mxu0
    %611 = vmatprep.subr.mxu0 %v374
    %612 = vmatpush1.msra.mxu0 %v373
    %613 = vmatprep.subr.mxu0 %v370
    %614 = vmatpush1.msra.mxu0 %v369
    %615 = vmatprep.subr.mxu0 %v366
    %616 = vmatpush1.msra.mxu0 %v365
    %617 = vmatprep.subr.mxu0 %v362
    %618 = vmatpush1.msra.mxu0 %v361
    %619 = vmatprep.subr.mxu0 %v358
    %620 = vmatpush1.msra.mxu0 %v357
    %621 = vmatprep.subr.mxu0 %v354
    %622 = vmatpush1.msra.mxu0 %v353
    %623 = vmatprep.subr.mxu0 %v350
    %624 = vmatpush1.msra.mxu0 %v349
    %625 = vmatprep.subr.mxu0 %v346
    %626 = vmatpush1.msra.mxu0 %v345
    %627 = vmatprep.subr.mxu0 %v342
    %628 = vmatpush1.msra.mxu0 %v341
    %629 = vmatprep.subr.mxu0 %v338
    %630 = vmatpush1.msra.mxu0 %v337
    %631 = vmatprep.subr.mxu0 %v334
    %632 = vmatpush1.msra.mxu0 %v333
    %633 = vmatprep.subr.mxu0 %v330
    %634 = vmatpush1.msra.mxu0 %v329
    %635 = vmatprep.subr.mxu0 %v326
    %636 = vmatpush1.msra.mxu0 %v325
    %637 = vmatprep.subr.mxu0 %v322
    %638 = vmatpush1.msra.mxu0 %v321
    %639 = vmatprep.subr.mxu0 %v318
    %640 = vmatpush1.msra.mxu0 %v317
    %641 = vmatprep.subr.mxu0 %v314
    %642 = vmatpush1.msra.mxu0 %v313
    %643 = vmatprep.subr.mxu0 0.0
    %644 = vmatpush2.msra.mxu0 0.0
    %645 = vmatprep.subr.mxu0 0.0
    %646 = vmatpush2.msra.mxu0 0.0
    %647 = vmatprep.subr.mxu0 0.0
    %648 = vmatpush2.msra.mxu0 0.0
    %649 = vmatprep.subr.mxu0 0.0
    %650 = vmatpush2.msra.mxu0 0.0
    %651 = vmatprep.subr.mxu0 0.0
    %652 = vmatpush2.msra.mxu0 0.0
    %653 = vmatprep.subr.mxu0 0.0
    %654 = vmatpush2.msra.mxu0 0.0
    %655 = vmatprep.subr.mxu0 0.0
    %656 = vmatpush2.msra.mxu0 0.0
    %657 = vmatprep.subr.mxu0 0.0
    %658 = vmatpush2.msra.mxu0 0.0
    %659 = vmatprep.subr.mxu0 0.0
    %660 = vmatpush2.msra.mxu0 0.0
    %661 = vmatprep.subr.mxu0 0.0
    %662 = vmatpush2.msra.mxu0 0.0
    %663 = vmatprep.subr.mxu0 0.0
    %664 = vmatpush2.msra.mxu0 0.0
    %665 = vmatprep.subr.mxu0 0.0
    %666 = vmatpush2.msra.mxu0 0.0
    %667 = vmatprep.subr.mxu0 0.0
    %668 = vmatpush2.msra.mxu0 0.0
    %669 = vmatprep.subr.mxu0 0.0
    %670 = vmatpush2.msra.mxu0 0.0
    %671 = vmatprep.subr.mxu0 0.0
    %672 = vmatpush2.msra.mxu0 0.0
    %673 = vmatprep.subr.mxu0 0.0
    %674 = vmatpush2.msra.mxu0 0.0
    %675 = vmatprep.mubr.f32.mxu0 0.0
    %676 = vmatmul.mubr.f32.gmra.mxu0 %v534
    %v677 = vpop.f32.mrf.mxu0
    %v678 = vadd.f32 %v538, %v677
    %v679 = vpop.f32.mrf.mxu0
    %v680 = vadd.f32 %v539, %v679
    %681 = vdwg.mxu0
    %v682 = vmul.f32 %v607, 0.5
    %v683 = vmul.f32 %v609, 0.5
    %v684 = vmul.f32 %v678, 0.5
    %v685 = vtanh.pop %v682
    %v686 = vtanh.pop %v683
    %v687 = vtanh.pop %v684
    %v688 = vmul.f32 %v685, 0.5
    %v689 = vmul.f32 %v686, 0.5
    %v690 = vmul.f32 %v687, 0.5
    %v691 = vadd.f32 %v688, 0.5
    %v692 = vadd.f32 %v689, 0.5
    %v693 = vadd.f32 %v690, 0.5
    %v694 = vtanh.pop %v680
    %v695 = vmul.f32 %v692, %v532
    %v696 = vmul.f32 %v691, %v694
    %v697 = vadd.f32 %v695, %v696
    %v698 = vtanh.pop %v697
    %v699 = vmul.f32 %v693, %v698
    %s700 = scalar_lea.vmem [#allocation2], 96
    %v701 = vld [vmem:[%s700] sm:$0xff]
    %v702 = vld [vmem:[%s700 + $0x8] sm:$0xff]
    %v703 = vld [vmem:[%s700 + $0x10] sm:$0xff]
    %v704 = vld [vmem:[%s700 + $0x18] sm:$0xff]
    %705 = vmatprep.subr.mxu0 %v372
    %706 = vmatpush1.msra.mxu0 %v371
    %707 = vmatprep.subr.mxu0 %v368
    %708 = vmatpush1.msra.mxu0 %v367
    %709 = vmatprep.subr.mxu0 %v364
    %710 = vmatpush1.msra.mxu0 %v363
    %711 = vmatprep.subr.mxu0 %v360
    %712 = vmatpush1.msra.mxu0 %v359
    %713 = vmatprep.subr.mxu0 %v356
    %714 = vmatpush1.msra.mxu0 %v355
    %715 = vmatprep.subr.mxu0 %v352
    %716 = vmatpush1.msra.mxu0 %v351
    %717 = vmatprep.subr.mxu0 %v348
    %718 = vmatpush1.msra.mxu0 %v347
    %719 = vmatprep.subr.mxu0 %v344
    %720 = vmatpush1.msra.mxu0 %v343
    %721 = vmatprep.subr.mxu0 %v340
    %722 = vmatpush1.msra.mxu0 %v339
    %723 = vmatprep.subr.mxu0 %v336
    %724 = vmatpush1.msra.mxu0 %v335
    %725 = vmatprep.subr.mxu0 %v332
    %726 = vmatpush1.msra.mxu0 %v331
    %727 = vmatprep.subr.mxu0 %v328
    %728 = vmatpush1.msra.mxu0 %v327
    %729 = vmatprep.subr.mxu0 %v324
    %730 = vmatpush1.msra.mxu0 %v323
    %731 = vmatprep.subr.mxu0 %v320
    %732 = vmatpush1.msra.mxu0 %v319
    %733 = vmatprep.subr.mxu0 %v316
    %734 = vmatpush1.msra.mxu0 %v315
    %735 = vmatprep.subr.mxu0 %v312
    %736 = vmatpush1.msra.mxu0 %v311
    %737 = vmatprep.subr.mxu0 0.0
    %738 = vmatpush2.msra.mxu0 0.0
    %739 = vmatprep.subr.mxu0 0.0
    %740 = vmatpush2.msra.mxu0 0.0
    %741 = vmatprep.subr.mxu0 0.0
    %742 = vmatpush2.msra.mxu0 0.0
    %743 = vmatprep.subr.mxu0 0.0
    %744 = vmatpush2.msra.mxu0 0.0
    %745 = vmatprep.subr.mxu0 0.0
    %746 = vmatpush2.msra.mxu0 0.0
    %747 = vmatprep.subr.mxu0 0.0
    %748 = vmatpush2.msra.mxu0 0.0
    %749 = vmatprep.subr.mxu0 0.0
    %750 = vmatpush2.msra.mxu0 0.0
    %751 = vmatprep.subr.mxu0 0.0
    %752 = vmatpush2.msra.mxu0 0.0
    %753 = vmatprep.subr.mxu0 0.0
    %754 = vmatpush2.msra.mxu0 0.0
    %755 = vmatprep.subr.mxu0 0.0
    %756 = vmatpush2.msra.mxu0 0.0
    %757 = vmatprep.subr.mxu0 0.0
    %758 = vmatpush2.msra.mxu0 0.0
    %759 = vmatprep.subr.mxu0 0.0
    %760 = vmatpush2.msra.mxu0 0.0
    %761 = vmatprep.subr.mxu0 0.0
    %762 = vmatpush2.msra.mxu0 0.0
    %763 = vmatprep.subr.mxu0 0.0
    %764 = vmatpush2.msra.mxu0 0.0
    %765 = vmatprep.subr.mxu0 0.0
    %766 = vmatpush2.msra.mxu0 0.0
    %767 = vmatprep.subr.mxu0 0.0
    %768 = vmatpush2.msra.mxu0 0.0
    %769 = vmatprep.mubr.f32.mxu0 0.0
    %770 = vmatmul.mubr.f32.gmra.mxu0 %v699
    %v771 = vpop.f32.mrf.mxu0
    %v772 = vadd.f32 %v701, %v771
    %v773 = vpop.f32.mrf.mxu0
    %v774 = vadd.f32 %v702, %v773
    %775 = vdwg.mxu0
    %776 = vmatprep.subr.mxu0 %v374
    %777 = vmatpush1.msra.mxu0 %v373
    %778 = vmatprep.subr.mxu0 %v370
    %779 = vmatpush1.msra.mxu0 %v369
    %780 = vmatprep.subr.mxu0 %v366
    %781 = vmatpush1.msra.mxu0 %v365
    %782 = vmatprep.subr.mxu0 %v362
    %783 = vmatpush1.msra.mxu0 %v361
    %784 = vmatprep.subr.mxu0 %v358
    %785 = vmatpush1.msra.mxu0 %v357
    %786 = vmatprep.subr.mxu0 %v354
    %787 = vmatpush1.msra.mxu0 %v353
    %788 = vmatprep.subr.mxu0 %v350
    %789 = vmatpush1.msra.mxu0 %v349
    %790 = vmatprep.subr.mxu0 %v346
    %791 = vmatpush1.msra.mxu0 %v345
    %792 = vmatprep.subr.mxu0 %v342
    %793 = vmatpush1.msra.mxu0 %v341
    %794 = vmatprep.subr.mxu0 %v338
    %795 = vmatpush1.msra.mxu0 %v337
    %796 = vmatprep.subr.mxu0 %v334
    %797 = vmatpush1.msra.mxu0 %v333
    %798 = vmatprep.subr.mxu0 %v330
    %799 = vmatpush1.msra.mxu0 %v329
    %800 = vmatprep.subr.mxu0 %v326
    %801 = vmatpush1.msra.mxu0 %v325
    %802 = vmatprep.subr.mxu0 %v322
    %803 = vmatpush1.msra.mxu0 %v321
    %804 = vmatprep.subr.mxu0 %v318
    %805 = vmatpush1.msra.mxu0 %v317
    %806 = vmatprep.subr.mxu0 %v314
    %807 = vmatpush1.msra.mxu0 %v313
    %808 = vmatprep.subr.mxu0 0.0
    %809 = vmatpush2.msra.mxu0 0.0
    %810 = vmatprep.subr.mxu0 0.0
    %811 = vmatpush2.msra.mxu0 0.0
    %812 = vmatprep.subr.mxu0 0.0
    %813 = vmatpush2.msra.mxu0 0.0
    %814 = vmatprep.subr.mxu0 0.0
    %815 = vmatpush2.msra.mxu0 0.0
    %816 = vmatprep.subr.mxu0 0.0
    %817 = vmatpush2.msra.mxu0 0.0
    %818 = vmatprep.subr.mxu0 0.0
    %819 = vmatpush2.msra.mxu0 0.0
    %820 = vmatprep.subr.mxu0 0.0
    %821 = vmatpush2.msra.mxu0 0.0
    %822 = vmatprep.subr.mxu0 0.0
    %823 = vmatpush2.msra.mxu0 0.0
    %824 = vmatprep.subr.mxu0 0.0
    %825 = vmatpush2.msra.mxu0 0.0
    %826 = vmatprep.subr.mxu0 0.0
    %827 = vmatpush2.msra.mxu0 0.0
    %828 = vmatprep.subr.mxu0 0.0
    %829 = vmatpush2.msra.mxu0 0.0
    %830 = vmatprep.subr.mxu0 0.0
    %831 = vmatpush2.msra.mxu0 0.0
    %832 = vmatprep.subr.mxu0 0.0
    %833 = vmatpush2.msra.mxu0 0.0
    %834 = vmatprep.subr.mxu0 0.0
    %835 = vmatpush2.msra.mxu0 0.0
    %836 = vmatprep.subr.mxu0 0.0
    %837 = vmatpush2.msra.mxu0 0.0
    %838 = vmatprep.subr.mxu0 0.0
    %839 = vmatpush2.msra.mxu0 0.0
    %840 = vmatprep.mubr.f32.mxu0 0.0
    %841 = vmatmul.mubr.f32.gmra.mxu0 %v699
    %v842 = vpop.f32.mrf.mxu0
    %v843 = vadd.f32 %v703, %v842
    %v844 = vpop.f32.mrf.mxu0
    %v845 = vadd.f32 %v704, %v844
    %846 = vdwg.mxu0
    %v847 = vmul.f32 %v772, 0.5
    %v848 = vmul.f32 %v774, 0.5
    %v849 = vmul.f32 %v843, 0.5
    %v850 = vtanh.pop %v847
    %v851 = vtanh.pop %v848
    %v852 = vtanh.pop %v849
    %v853 = vmul.f32 %v850, 0.5
    %v854 = vmul.f32 %v851, 0.5
    %v855 = vmul.f32 %v852, 0.5
    %v856 = vadd.f32 %v853, 0.5
    %v857 = vadd.f32 %v854, 0.5
    %v858 = vadd.f32 %v855, 0.5
    %v859 = vtanh.pop %v845
    %v860 = vmul.f32 %v857, %v697
    %v861 = vmul.f32 %v856, %v859
    %v862 = vadd.f32 %v860, %v861
    %v863 = vtanh.pop %v862
    %v864 = vmul.f32 %v858, %v863
    %s865 = scalar_lea.vmem [#allocation2], 128
    %v866 = vld [vmem:[%s865] sm:$0xff]
    %v867 = vld [vmem:[%s865 + $0x8] sm:$0xff]
    %v868 = vld [vmem:[%s865 + $0x10] sm:$0xff]
    %v869 = vld [vmem:[%s865 + $0x18] sm:$0xff]
    %870 = vmatprep.subr.mxu0 %v372
    %871 = vmatpush1.msra.mxu0 %v371
    %872 = vmatprep.subr.mxu0 %v368
    %873 = vmatpush1.msra.mxu0 %v367
    %874 = vmatprep.subr.mxu0 %v364
    %875 = vmatpush1.msra.mxu0 %v363
    %876 = vmatprep.subr.mxu0 %v360
    %877 = vmatpush1.msra.mxu0 %v359
    %878 = vmatprep.subr.mxu0 %v356
    %879 = vmatpush1.msra.mxu0 %v355
    %880 = vmatprep.subr.mxu0 %v352
    %881 = vmatpush1.msra.mxu0 %v351
    %882 = vmatprep.subr.mxu0 %v348
    %883 = vmatpush1.msra.mxu0 %v347
    %884 = vmatprep.subr.mxu0 %v344
    %885 = vmatpush1.msra.mxu0 %v343
    %886 = vmatprep.subr.mxu0 %v340
    %887 = vmatpush1.msra.mxu0 %v339
    %888 = vmatprep.subr.mxu0 %v336
    %889 = vmatpush1.msra.mxu0 %v335
    %890 = vmatprep.subr.mxu0 %v332
    %891 = vmatpush1.msra.mxu0 %v331
    %892 = vmatprep.subr.mxu0 %v328
    %893 = vmatpush1.msra.mxu0 %v327
    %894 = vmatprep.subr.mxu0 %v324
    %895 = vmatpush1.msra.mxu0 %v323
    %896 = vmatprep.subr.mxu0 %v320
    %897 = vmatpush1.msra.mxu0 %v319
    %898 = vmatprep.subr.mxu0 %v316
    %899 = vmatpush1.msra.mxu0 %v315
    %900 = vmatprep.subr.mxu0 %v312
    %901 = vmatpush1.msra.mxu0 %v311
    %902 = vmatprep.subr.mxu0 0.0
    %903 = vmatpush2.msra.mxu0 0.0
    %904 = vmatprep.subr.mxu0 0.0
    %905 = vmatpush2.msra.mxu0 0.0
    %906 = vmatprep.subr.mxu0 0.0
    %907 = vmatpush2.msra.mxu0 0.0
    %908 = vmatprep.subr.mxu0 0.0
    %909 = vmatpush2.msra.mxu0 0.0
    %910 = vmatprep.subr.mxu0 0.0
    %911 = vmatpush2.msra.mxu0 0.0
    %912 = vmatprep.subr.mxu0 0.0
    %913 = vmatpush2.msra.mxu0 0.0
    %914 = vmatprep.subr.mxu0 0.0
    %915 = vmatpush2.msra.mxu0 0.0
    %916 = vmatprep.subr.mxu0 0.0
    %917 = vmatpush2.msra.mxu0 0.0
    %918 = vmatprep.subr.mxu0 0.0
    %919 = vmatpush2.msra.mxu0 0.0
    %920 = vmatprep.subr.mxu0 0.0
    %921 = vmatpush2.msra.mxu0 0.0
    %922 = vmatprep.subr.mxu0 0.0
    %923 = vmatpush2.msra.mxu0 0.0
    %924 = vmatprep.subr.mxu0 0.0
    %925 = vmatpush2.msra.mxu0 0.0
    %926 = vmatprep.subr.mxu0 0.0
    %927 = vmatpush2.msra.mxu0 0.0
    %928 = vmatprep.subr.mxu0 0.0
    %929 = vmatpush2.msra.mxu0 0.0
    %930 = vmatprep.subr.mxu0 0.0
    %931 = vmatpush2.msra.mxu0 0.0
    %932 = vmatprep.subr.mxu0 0.0
    %933 = vmatpush2.msra.mxu0 0.0
    %934 = vmatprep.mubr.f32.mxu0 0.0
    %935 = vmatmul.mubr.f32.gmra.mxu0 %v864
    %v936 = vpop.f32.mrf.mxu0
    %v937 = vadd.f32 %v866, %v936
    %v938 = vpop.f32.mrf.mxu0
    %v939 = vadd.f32 %v867, %v938
    %940 = vdwg.mxu0
    %941 = vmatprep.subr.mxu0 %v374
    %942 = vmatpush1.msra.mxu0 %v373
    %943 = vmatprep.subr.mxu0 %v370
    %944 = vmatpush1.msra.mxu0 %v369
    %945 = vmatprep.subr.mxu0 %v366
    %946 = vmatpush1.msra.mxu0 %v365
    %947 = vmatprep.subr.mxu0 %v362
    %948 = vmatpush1.msra.mxu0 %v361
    %949 = vmatprep.subr.mxu0 %v358
    %950 = vmatpush1.msra.mxu0 %v357
    %951 = vmatprep.subr.mxu0 %v354
    %952 = vmatpush1.msra.mxu0 %v353
    %953 = vmatprep.subr.mxu0 %v350
    %954 = vmatpush1.msra.mxu0 %v349
    %955 = vmatprep.subr.mxu0 %v346
    %956 = vmatpush1.msra.mxu0 %v345
    %957 = vmatprep.subr.mxu0 %v342
    %958 = vmatpush1.msra.mxu0 %v341
    %959 = vmatprep.subr.mxu0 %v338
    %960 = vmatpush1.msra.mxu0 %v337
    %961 = vmatprep.subr.mxu0 %v334
    %962 = vmatpush1.msra.mxu0 %v333
    %963 = vmatprep.subr.mxu0 %v330
    %964 = vmatpush1.msra.mxu0 %v329
    %965 = vmatprep.subr.mxu0 %v326
    %966 = vmatpush1.msra.mxu0 %v325
    %967 = vmatprep.subr.mxu0 %v322
    %968 = vmatpush1.msra.mxu0 %v321
    %969 = vmatprep.subr.mxu0 %v318
    %970 = vmatpush1.msra.mxu0 %v317
    %971 = vmatprep.subr.mxu0 %v314
    %972 = vmatpush1.msra.mxu0 %v313
    %973 = vmatprep.subr.mxu0 0.0
    %974 = vmatpush2.msra.mxu0 0.0
    %975 = vmatprep.subr.mxu0 0.0
    %976 = vmatpush2.msra.mxu0 0.0
    %977 = vmatprep.subr.mxu0 0.0
    %978 = vmatpush2.msra.mxu0 0.0
    %979 = vmatprep.subr.mxu0 0.0
    %980 = vmatpush2.msra.mxu0 0.0
    %981 = vmatprep.subr.mxu0 0.0
    %982 = vmatpush2.msra.mxu0 0.0
    %983 = vmatprep.subr.mxu0 0.0
    %984 = vmatpush2.msra.mxu0 0.0
    %985 = vmatprep.subr.mxu0 0.0
    %986 = vmatpush2.msra.mxu0 0.0
    %987 = vmatprep.subr.mxu0 0.0
    %988 = vmatpush2.msra.mxu0 0.0
    %989 = vmatprep.subr.mxu0 0.0
    %990 = vmatpush2.msra.mxu0 0.0
    %991 = vmatprep.subr.mxu0 0.0
    %992 = vmatpush2.msra.mxu0 0.0
    %993 = vmatprep.subr.mxu0 0.0
    %994 = vmatpush2.msra.mxu0 0.0
    %995 = vmatprep.subr.mxu0 0.0
    %996 = vmatpush2.msra.mxu0 0.0
    %997 = vmatprep.subr.mxu0 0.0
    %998 = vmatpush2.msra.mxu0 0.0
    %999 = vmatprep.subr.mxu0 0.0
    %1000 = vmatpush2.msra.mxu0 0.0
    %1001 = vmatprep.subr.mxu0 0.0
    %1002 = vmatpush2.msra.mxu0 0.0
    %1003 = vmatprep.subr.mxu0 0.0
    %1004 = vmatpush2.msra.mxu0 0.0
    %1005 = vmatprep.mubr.f32.mxu0 0.0
    %1006 = vmatmul.mubr.f32.gmra.mxu0 %v864
    %v1007 = vpop.f32.mrf.mxu0
    %v1008 = vadd.f32 %v868, %v1007
    %v1009 = vpop.f32.mrf.mxu0
    %v1010 = vadd.f32 %v869, %v1009
    %1011 = vdwg.mxu0
    %v1012 = vmul.f32 %v937, 0.5
    %v1013 = vmul.f32 %v939, 0.5
    %v1014 = vmul.f32 %v1008, 0.5
    %v1015 = vtanh.pop %v1012
    %v1016 = vtanh.pop %v1013
    %v1017 = vtanh.pop %v1014
    %v1018 = vmul.f32 %v1015, 0.5
    %v1019 = vmul.f32 %v1016, 0.5
    %v1020 = vmul.f32 %v1017, 0.5
    %v1021 = vadd.f32 %v1018, 0.5
    %v1022 = vadd.f32 %v1019, 0.5
    %v1023 = vadd.f32 %v1020, 0.5
    %v1024 = vtanh.pop %v1010
    %v1025 = vmul.f32 %v1022, %v862
    %v1026 = vmul.f32 %v1021, %v1024
    %v1027 = vadd.f32 %v1025, %v1026
    %v1028 = vtanh.pop %v1027
    %v1029 = vmul.f32 %v1023, %v1028
    %s1030 = scalar_lea.vmem [#allocation2], 160
    %v1031 = vld [vmem:[%s1030] sm:$0xff]
    %v1032 = vld [vmem:[%s1030 + $0x8] sm:$0xff]
    %v1033 = vld [vmem:[%s1030 + $0x10] sm:$0xff]
    %v1034 = vld [vmem:[%s1030 + $0x18] sm:$0xff]
    %1035 = vmatprep.subr.mxu0 %v372
    %1036 = vmatpush1.msra.mxu0 %v371
    %1037 = vmatprep.subr.mxu0 %v368
    %1038 = vmatpush1.msra.mxu0 %v367
    %1039 = vmatprep.subr.mxu0 %v364
    %1040 = vmatpush1.msra.mxu0 %v363
    %1041 = vmatprep.subr.mxu0 %v360
    %1042 = vmatpush1.msra.mxu0 %v359
    %1043 = vmatprep.subr.mxu0 %v356
    %1044 = vmatpush1.msra.mxu0 %v355
    %1045 = vmatprep.subr.mxu0 %v352
    %1046 = vmatpush1.msra.mxu0 %v351
    %1047 = vmatprep.subr.mxu0 %v348
    %1048 = vmatpush1.msra.mxu0 %v347
    %1049 = vmatprep.subr.mxu0 %v344
    %1050 = vmatpush1.msra.mxu0 %v343
    %1051 = vmatprep.subr.mxu0 %v340
    %1052 = vmatpush1.msra.mxu0 %v339
    %1053 = vmatprep.subr.mxu0 %v336
    %1054 = vmatpush1.msra.mxu0 %v335
    %1055 = vmatprep.subr.mxu0 %v332
    %1056 = vmatpush1.msra.mxu0 %v331
    %1057 = vmatprep.subr.mxu0 %v328
    %1058 = vmatpush1.msra.mxu0 %v327
    %1059 = vmatprep.subr.mxu0 %v324
    %1060 = vmatpush1.msra.mxu0 %v323
    %1061 = vmatprep.subr.mxu0 %v320
    %1062 = vmatpush1.msra.mxu0 %v319
    %1063 = vmatprep.subr.mxu0 %v316
    %1064 = vmatpush1.msra.mxu0 %v315
    %1065 = vmatprep.subr.mxu0 %v312
    %1066 = vmatpush1.msra.mxu0 %v311
    %1067 = vmatprep.subr.mxu0 0.0
    %1068 = vmatpush2.msra.mxu0 0.0
    %1069 = vmatprep.subr.mxu0 0.0
    %1070 = vmatpush2.msra.mxu0 0.0
    %1071 = vmatprep.subr.mxu0 0.0
    %1072 = vmatpush2.msra.mxu0 0.0
    %1073 = vmatprep.subr.mxu0 0.0
    %1074 = vmatpush2.msra.mxu0 0.0
    %1075 = vmatprep.subr.mxu0 0.0
    %1076 = vmatpush2.msra.mxu0 0.0
    %1077 = vmatprep.subr.mxu0 0.0
    %1078 = vmatpush2.msra.mxu0 0.0
    %1079 = vmatprep.subr.mxu0 0.0
    %1080 = vmatpush2.msra.mxu0 0.0
    %1081 = vmatprep.subr.mxu0 0.0
    %1082 = vmatpush2.msra.mxu0 0.0
    %1083 = vmatprep.subr.mxu0 0.0
    %1084 = vmatpush2.msra.mxu0 0.0
    %1085 = vmatprep.subr.mxu0 0.0
    %1086 = vmatpush2.msra.mxu0 0.0
    %1087 = vmatprep.subr.mxu0 0.0
    %1088 = vmatpush2.msra.mxu0 0.0
    %1089 = vmatprep.subr.mxu0 0.0
    %1090 = vmatpush2.msra.mxu0 0.0
    %1091 = vmatprep.subr.mxu0 0.0
    %1092 = vmatpush2.msra.mxu0 0.0
    %1093 = vmatprep.subr.mxu0 0.0
    %1094 = vmatpush2.msra.mxu0 0.0
    %1095 = vmatprep.subr.mxu0 0.0
    %1096 = vmatpush2.msra.mxu0 0.0
    %1097 = vmatprep.subr.mxu0 0.0
    %1098 = vmatpush2.msra.mxu0 0.0
    %1099 = vmatprep.mubr.f32.mxu0 0.0
    %1100 = vmatmul.mubr.f32.gmra.mxu0 %v1029
    %v1101 = vpop.f32.mrf.mxu0
    %v1102 = vadd.f32 %v1031, %v1101
    %v1103 = vpop.f32.mrf.mxu0
    %v1104 = vadd.f32 %v1032, %v1103
    %1105 = vdwg.mxu0
    %1106 = vmatprep.subr.mxu0 %v374
    %1107 = vmatpush1.msra.mxu0 %v373
    %1108 = vmatprep.subr.mxu0 %v370
    %1109 = vmatpush1.msra.mxu0 %v369
    %1110 = vmatprep.subr.mxu0 %v366
    %1111 = vmatpush1.msra.mxu0 %v365
    %1112 = vmatprep.subr.mxu0 %v362
    %1113 = vmatpush1.msra.mxu0 %v361
    %1114 = vmatprep.subr.mxu0 %v358
    %1115 = vmatpush1.msra.mxu0 %v357
    %1116 = vmatprep.subr.mxu0 %v354
    %1117 = vmatpush1.msra.mxu0 %v353
    %1118 = vmatprep.subr.mxu0 %v350
    %1119 = vmatpush1.msra.mxu0 %v349
    %1120 = vmatprep.subr.mxu0 %v346
    %1121 = vmatpush1.msra.mxu0 %v345
    %1122 = vmatprep.subr.mxu0 %v342
    %1123 = vmatpush1.msra.mxu0 %v341
    %1124 = vmatprep.subr.mxu0 %v338
    %1125 = vmatpush1.msra.mxu0 %v337
    %1126 = vmatprep.subr.mxu0 %v334
    %1127 = vmatpush1.msra.mxu0 %v333
    %1128 = vmatprep.subr.mxu0 %v330
    %1129 = vmatpush1.msra.mxu0 %v329
    %1130 = vmatprep.subr.mxu0 %v326
    %1131 = vmatpush1.msra.mxu0 %v325
    %1132 = vmatprep.subr.mxu0 %v322
    %1133 = vmatpush1.msra.mxu0 %v321
    %1134 = vmatprep.subr.mxu0 %v318
    %1135 = vmatpush1.msra.mxu0 %v317
    %1136 = vmatprep.subr.mxu0 %v314
    %1137 = vmatpush1.msra.mxu0 %v313
    %1138 = vmatprep.subr.mxu0 0.0
    %1139 = vmatpush2.msra.mxu0 0.0
    %1140 = vmatprep.subr.mxu0 0.0
    %1141 = vmatpush2.msra.mxu0 0.0
    %1142 = vmatprep.subr.mxu0 0.0
    %1143 = vmatpush2.msra.mxu0 0.0
    %1144 = vmatprep.subr.mxu0 0.0
    %1145 = vmatpush2.msra.mxu0 0.0
    %1146 = vmatprep.subr.mxu0 0.0
    %1147 = vmatpush2.msra.mxu0 0.0
    %1148 = vmatprep.subr.mxu0 0.0
    %1149 = vmatpush2.msra.mxu0 0.0
    %1150 = vmatprep.subr.mxu0 0.0
    %1151 = vmatpush2.msra.mxu0 0.0
    %1152 = vmatprep.subr.mxu0 0.0
    %1153 = vmatpush2.msra.mxu0 0.0
    %1154 = vmatprep.subr.mxu0 0.0
    %1155 = vmatpush2.msra.mxu0 0.0
    %1156 = vmatprep.subr.mxu0 0.0
    %1157 = vmatpush2.msra.mxu0 0.0
    %1158 = vmatprep.subr.mxu0 0.0
    %1159 = vmatpush2.msra.mxu0 0.0
    %1160 = vmatprep.subr.mxu0 0.0
    %1161 = vmatpush2.msra.mxu0 0.0
    %1162 = vmatprep.subr.mxu0 0.0
    %1163 = vmatpush2.msra.mxu0 0.0
    %1164 = vmatprep.subr.mxu0 0.0
    %1165 = vmatpush2.msra.mxu0 0.0
    %1166 = vmatprep.subr.mxu0 0.0
    %1167 = vmatpush2.msra.mxu0 0.0
    %1168 = vmatprep.subr.mxu0 0.0
    %1169 = vmatpush2.msra.mxu0 0.0
    %1170 = vmatprep.mubr.f32.mxu0 0.0
    %1171 = vmatmul.mubr.f32.gmra.mxu0 %v1029
    %v1172 = vpop.f32.mrf.mxu0
    %v1173 = vadd.f32 %v1033, %v1172
    %v1174 = vpop.f32.mrf.mxu0
    %v1175 = vadd.f32 %v1034, %v1174
    %1176 = vdwg.mxu0
    %v1177 = vmul.f32 %v1102, 0.5
    %v1178 = vmul.f32 %v1104, 0.5
    %v1179 = vmul.f32 %v1173, 0.5
    %v1180 = vtanh.pop %v1177
    %v1181 = vtanh.pop %v1178
    %v1182 = vtanh.pop %v1179
    %v1183 = vmul.f32 %v1180, 0.5
    %v1184 = vmul.f32 %v1181, 0.5
    %v1185 = vmul.f32 %v1182, 0.5
    %v1186 = vadd.f32 %v1183, 0.5
    %v1187 = vadd.f32 %v1184, 0.5
    %v1188 = vadd.f32 %v1185, 0.5
    %v1189 = vtanh.pop %v1175
    %v1190 = vmul.f32 %v1187, %v1027
    %v1191 = vmul.f32 %v1186, %v1189
    %v1192 = vadd.f32 %v1190, %v1191
    %v1193 = vtanh.pop %v1192
    %v1194 = vmul.f32 %v1188, %v1193
    %s1195 = scalar_lea.vmem [#allocation2], 192
    %v1196 = vld [vmem:[%s1195] sm:$0xff]
    %v1197 = vld [vmem:[%s1195 + $0x8] sm:$0xff]
    %v1198 = vld [vmem:[%s1195 + $0x10] sm:$0xff]
    %v1199 = vld [vmem:[%s1195 + $0x18] sm:$0xff]
    %1200 = vmatprep.subr.mxu0 %v372
    %1201 = vmatpush1.msra.mxu0 %v371
    %1202 = vmatprep.subr.mxu0 %v368
    %1203 = vmatpush1.msra.mxu0 %v367
    %1204 = vmatprep.subr.mxu0 %v364
    %1205 = vmatpush1.msra.mxu0 %v363
    %1206 = vmatprep.subr.mxu0 %v360
    %1207 = vmatpush1.msra.mxu0 %v359
    %1208 = vmatprep.subr.mxu0 %v356
    %1209 = vmatpush1.msra.mxu0 %v355
    %1210 = vmatprep.subr.mxu0 %v352
    %1211 = vmatpush1.msra.mxu0 %v351
    %1212 = vmatprep.subr.mxu0 %v348
    %1213 = vmatpush1.msra.mxu0 %v347
    %1214 = vmatprep.subr.mxu0 %v344
    %1215 = vmatpush1.msra.mxu0 %v343
    %1216 = vmatprep.subr.mxu0 %v340
    %1217 = vmatpush1.msra.mxu0 %v339
    %1218 = vmatprep.subr.mxu0 %v336
    %1219 = vmatpush1.msra.mxu0 %v335
    %1220 = vmatprep.subr.mxu0 %v332
    %1221 = vmatpush1.msra.mxu0 %v331
    %1222 = vmatprep.subr.mxu0 %v328
    %1223 = vmatpush1.msra.mxu0 %v327
    %1224 = vmatprep.subr.mxu0 %v324
    %1225 = vmatpush1.msra.mxu0 %v323
    %1226 = vmatprep.subr.mxu0 %v320
    %1227 = vmatpush1.msra.mxu0 %v319
    %1228 = vmatprep.subr.mxu0 %v316
    %1229 = vmatpush1.msra.mxu0 %v315
    %1230 = vmatprep.subr.mxu0 %v312
    %1231 = vmatpush1.msra.mxu0 %v311
    %1232 = vmatprep.subr.mxu0 0.0
    %1233 = vmatpush2.msra.mxu0 0.0
    %1234 = vmatprep.subr.mxu0 0.0
    %1235 = vmatpush2.msra.mxu0 0.0
    %1236 = vmatprep.subr.mxu0 0.0
    %1237 = vmatpush2.msra.mxu0 0.0
    %1238 = vmatprep.subr.mxu0 0.0
    %1239 = vmatpush2.msra.mxu0 0.0
    %1240 = vmatprep.subr.mxu0 0.0
    %1241 = vmatpush2.msra.mxu0 0.0
    %1242 = vmatprep.subr.mxu0 0.0
    %1243 = vmatpush2.msra.mxu0 0.0
    %1244 = vmatprep.subr.mxu0 0.0
    %1245 = vmatpush2.msra.mxu0 0.0
    %1246 = vmatprep.subr.mxu0 0.0
    %1247 = vmatpush2.msra.mxu0 0.0
    %1248 = vmatprep.subr.mxu0 0.0
    %1249 = vmatpush2.msra.mxu0 0.0
    %1250 = vmatprep.subr.mxu0 0.0
    %1251 = vmatpush2.msra.mxu0 0.0
    %1252 = vmatprep.subr.mxu0 0.0
    %1253 = vmatpush2.msra.mxu0 0.0
    %1254 = vmatprep.subr.mxu0 0.0
    %1255 = vmatpush2.msra.mxu0 0.0
    %1256 = vmatprep.subr.mxu0 0.0
    %1257 = vmatpush2.msra.mxu0 0.0
    %1258 = vmatprep.subr.mxu0 0.0
    %1259 = vmatpush2.msra.mxu0 0.0
    %1260 = vmatprep.subr.mxu0 0.0
    %1261 = vmatpush2.msra.mxu0 0.0
    %1262 = vmatprep.subr.mxu0 0.0
    %1263 = vmatpush2.msra.mxu0 0.0
    %1264 = vmatprep.mubr.f32.mxu0 0.0
    %1265 = vmatmul.mubr.f32.gmra.mxu0 %v1194
    %v1266 = vpop.f32.mrf.mxu0
    %v1267 = vadd.f32 %v1196, %v1266
    %v1268 = vpop.f32.mrf.mxu0
    %v1269 = vadd.f32 %v1197, %v1268
    %1270 = vdwg.mxu0
    %1271 = vmatprep.subr.mxu0 %v374
    %1272 = vmatpush1.msra.mxu0 %v373
    %1273 = vmatprep.subr.mxu0 %v370
    %1274 = vmatpush1.msra.mxu0 %v369
    %1275 = vmatprep.subr.mxu0 %v366
    %1276 = vmatpush1.msra.mxu0 %v365
    %1277 = vmatprep.subr.mxu0 %v362
    %1278 = vmatpush1.msra.mxu0 %v361
    %1279 = vmatprep.subr.mxu0 %v358
    %1280 = vmatpush1.msra.mxu0 %v357
    %1281 = vmatprep.subr.mxu0 %v354
    %1282 = vmatpush1.msra.mxu0 %v353
    %1283 = vmatprep.subr.mxu0 %v350
    %1284 = vmatpush1.msra.mxu0 %v349
    %1285 = vmatprep.subr.mxu0 %v346
    %1286 = vmatpush1.msra.mxu0 %v345
    %1287 = vmatprep.subr.mxu0 %v342
    %1288 = vmatpush1.msra.mxu0 %v341
    %1289 = vmatprep.subr.mxu0 %v338
    %1290 = vmatpush1.msra.mxu0 %v337
    %1291 = vmatprep.subr.mxu0 %v334
    %1292 = vmatpush1.msra.mxu0 %v333
    %1293 = vmatprep.subr.mxu0 %v330
    %1294 = vmatpush1.msra.mxu0 %v329
    %1295 = vmatprep.subr.mxu0 %v326
    %1296 = vmatpush1.msra.mxu0 %v325
    %1297 = vmatprep.subr.mxu0 %v322
    %1298 = vmatpush1.msra.mxu0 %v321
    %1299 = vmatprep.subr.mxu0 %v318
    %1300 = vmatpush1.msra.mxu0 %v317
    %1301 = vmatprep.subr.mxu0 %v314
    %1302 = vmatpush1.msra.mxu0 %v313
    %1303 = vmatprep.subr.mxu0 0.0
    %1304 = vmatpush2.msra.mxu0 0.0
    %1305 = vmatprep.subr.mxu0 0.0
    %1306 = vmatpush2.msra.mxu0 0.0
    %1307 = vmatprep.subr.mxu0 0.0
    %1308 = vmatpush2.msra.mxu0 0.0
    %1309 = vmatprep.subr.mxu0 0.0
    %1310 = vmatpush2.msra.mxu0 0.0
    %1311 = vmatprep.subr.mxu0 0.0
    %1312 = vmatpush2.msra.mxu0 0.0
    %1313 = vmatprep.subr.mxu0 0.0
    %1314 = vmatpush2.msra.mxu0 0.0
    %1315 = vmatprep.subr.mxu0 0.0
    %1316 = vmatpush2.msra.mxu0 0.0
    %1317 = vmatprep.subr.mxu0 0.0
    %1318 = vmatpush2.msra.mxu0 0.0
    %1319 = vmatprep.subr.mxu0 0.0
    %1320 = vmatpush2.msra.mxu0 0.0
    %1321 = vmatprep.subr.mxu0 0.0
    %1322 = vmatpush2.msra.mxu0 0.0
    %1323 = vmatprep.subr.mxu0 0.0
    %1324 = vmatpush2.msra.mxu0 0.0
    %1325 = vmatprep.subr.mxu0 0.0
    %1326 = vmatpush2.msra.mxu0 0.0
    %1327 = vmatprep.subr.mxu0 0.0
    %1328 = vmatpush2.msra.mxu0 0.0
    %1329 = vmatprep.subr.mxu0 0.0
    %1330 = vmatpush2.msra.mxu0 0.0
    %1331 = vmatprep.subr.mxu0 0.0
    %1332 = vmatpush2.msra.mxu0 0.0
    %1333 = vmatprep.subr.mxu0 0.0
    %1334 = vmatpush2.msra.mxu0 0.0
    %1335 = vmatprep.mubr.f32.mxu0 0.0
    %1336 = vmatmul.mubr.f32.gmra.mxu0 %v1194
    %v1337 = vpop.f32.mrf.mxu0
    %v1338 = vadd.f32 %v1198, %v1337
    %v1339 = vpop.f32.mrf.mxu0
    %v1340 = vadd.f32 %v1199, %v1339
    %1341 = vdwg.mxu0
    %v1342 = vmul.f32 %v1267, 0.5
    %v1343 = vmul.f32 %v1269, 0.5
    %v1344 = vmul.f32 %v1338, 0.5
    %v1345 = vtanh.pop %v1342
    %v1346 = vtanh.pop %v1343
    %v1347 = vtanh.pop %v1344
    %v1348 = vmul.f32 %v1345, 0.5
    %v1349 = vmul.f32 %v1346, 0.5
    %v1350 = vmul.f32 %v1347, 0.5
    %v1351 = vadd.f32 %v1348, 0.5
    %v1352 = vadd.f32 %v1349, 0.5
    %v1353 = vadd.f32 %v1350, 0.5
    %v1354 = vtanh.pop %v1340
    %v1355 = vmul.f32 %v1352, %v1192
    %v1356 = vmul.f32 %v1351, %v1354
    %v1357 = vadd.f32 %v1355, %v1356
    %v1358 = vtanh.pop %v1357
    %v1359 = vmul.f32 %v1353, %v1358
    %s1360 = scalar_lea.vmem [#allocation2], 224
    %v1361 = vld [vmem:[%s1360] sm:$0xff]
    %v1362 = vld [vmem:[%s1360 + $0x8] sm:$0xff]
    %v1363 = vld [vmem:[%s1360 + $0x10] sm:$0xff]
    %v1364 = vld [vmem:[%s1360 + $0x18] sm:$0xff]
    %1365 = vmatprep.subr.mxu0 %v372
    %1366 = vmatpush1.msra.mxu0 %v371
    %1367 = vmatprep.subr.mxu0 %v368
    %1368 = vmatpush1.msra.mxu0 %v367
    %1369 = vmatprep.subr.mxu0 %v364
    %1370 = vmatpush1.msra.mxu0 %v363
    %1371 = vmatprep.subr.mxu0 %v360
    %1372 = vmatpush1.msra.mxu0 %v359
    %1373 = vmatprep.subr.mxu0 %v356
    %1374 = vmatpush1.msra.mxu0 %v355
    %1375 = vmatprep.subr.mxu0 %v352
    %1376 = vmatpush1.msra.mxu0 %v351
    %1377 = vmatprep.subr.mxu0 %v348
    %1378 = vmatpush1.msra.mxu0 %v347
    %1379 = vmatprep.subr.mxu0 %v344
    %1380 = vmatpush1.msra.mxu0 %v343
    %1381 = vmatprep.subr.mxu0 %v340
    %1382 = vmatpush1.msra.mxu0 %v339
    %1383 = vmatprep.subr.mxu0 %v336
    %1384 = vmatpush1.msra.mxu0 %v335
    %1385 = vmatprep.subr.mxu0 %v332
    %1386 = vmatpush1.msra.mxu0 %v331
    %1387 = vmatprep.subr.mxu0 %v328
    %1388 = vmatpush1.msra.mxu0 %v327
    %1389 = vmatprep.subr.mxu0 %v324
    %1390 = vmatpush1.msra.mxu0 %v323
    %1391 = vmatprep.subr.mxu0 %v320
    %1392 = vmatpush1.msra.mxu0 %v319
    %1393 = vmatprep.subr.mxu0 %v316
    %1394 = vmatpush1.msra.mxu0 %v315
    %1395 = vmatprep.subr.mxu0 %v312
    %1396 = vmatpush1.msra.mxu0 %v311
    %1397 = vmatprep.subr.mxu0 0.0
    %1398 = vmatpush2.msra.mxu0 0.0
    %1399 = vmatprep.subr.mxu0 0.0
    %1400 = vmatpush2.msra.mxu0 0.0
    %1401 = vmatprep.subr.mxu0 0.0
    %1402 = vmatpush2.msra.mxu0 0.0
    %1403 = vmatprep.subr.mxu0 0.0
    %1404 = vmatpush2.msra.mxu0 0.0
    %1405 = vmatprep.subr.mxu0 0.0
    %1406 = vmatpush2.msra.mxu0 0.0
    %1407 = vmatprep.subr.mxu0 0.0
    %1408 = vmatpush2.msra.mxu0 0.0
    %1409 = vmatprep.subr.mxu0 0.0
    %1410 = vmatpush2.msra.mxu0 0.0
    %1411 = vmatprep.subr.mxu0 0.0
    %1412 = vmatpush2.msra.mxu0 0.0
    %1413 = vmatprep.subr.mxu0 0.0
    %1414 = vmatpush2.msra.mxu0 0.0
    %1415 = vmatprep.subr.mxu0 0.0
    %1416 = vmatpush2.msra.mxu0 0.0
    %1417 = vmatprep.subr.mxu0 0.0
    %1418 = vmatpush2.msra.mxu0 0.0
    %1419 = vmatprep.subr.mxu0 0.0
    %1420 = vmatpush2.msra.mxu0 0.0
    %1421 = vmatprep.subr.mxu0 0.0
    %1422 = vmatpush2.msra.mxu0 0.0
    %1423 = vmatprep.subr.mxu0 0.0
    %1424 = vmatpush2.msra.mxu0 0.0
    %1425 = vmatprep.subr.mxu0 0.0
    %1426 = vmatpush2.msra.mxu0 0.0
    %1427 = vmatprep.subr.mxu0 0.0
    %1428 = vmatpush2.msra.mxu0 0.0
    %1429 = vmatprep.mubr.f32.mxu0 0.0
    %1430 = vmatmul.mubr.f32.gmra.mxu0 %v1359
    %v1431 = vpop.f32.mrf.mxu0
    %v1432 = vadd.f32 %v1361, %v1431
    %v1433 = vpop.f32.mrf.mxu0
    %v1434 = vadd.f32 %v1362, %v1433
    %1435 = vdwg.mxu0
    %1436 = vmatprep.subr.mxu0 %v374
    %1437 = vmatpush1.msra.mxu0 %v373
    %1438 = vmatprep.subr.mxu0 %v370
    %1439 = vmatpush1.msra.mxu0 %v369
    %1440 = vmatprep.subr.mxu0 %v366
    %1441 = vmatpush1.msra.mxu0 %v365
    %1442 = vmatprep.subr.mxu0 %v362
    %1443 = vmatpush1.msra.mxu0 %v361
    %1444 = vmatprep.subr.mxu0 %v358
    %1445 = vmatpush1.msra.mxu0 %v357
    %1446 = vmatprep.subr.mxu0 %v354
    %1447 = vmatpush1.msra.mxu0 %v353
    %1448 = vmatprep.subr.mxu0 %v350
    %1449 = vmatpush1.msra.mxu0 %v349
    %1450 = vmatprep.subr.mxu0 %v346
    %1451 = vmatpush1.msra.mxu0 %v345
    %1452 = vmatprep.subr.mxu0 %v342
    %1453 = vmatpush1.msra.mxu0 %v341
    %1454 = vmatprep.subr.mxu0 %v338
    %1455 = vmatpush1.msra.mxu0 %v337
    %1456 = vmatprep.subr.mxu0 %v334
    %1457 = vmatpush1.msra.mxu0 %v333
    %1458 = vmatprep.subr.mxu0 %v330
    %1459 = vmatpush1.msra.mxu0 %v329
    %1460 = vmatprep.subr.mxu0 %v326
    %1461 = vmatpush1.msra.mxu0 %v325
    %1462 = vmatprep.subr.mxu0 %v322
    %1463 = vmatpush1.msra.mxu0 %v321
    %1464 = vmatprep.subr.mxu0 %v318
    %1465 = vmatpush1.msra.mxu0 %v317
    %1466 = vmatprep.subr.mxu0 %v314
    %1467 = vmatpush1.msra.mxu0 %v313
    %1468 = vmatprep.subr.mxu0 0.0
    %1469 = vmatpush2.msra.mxu0 0.0
    %1470 = vmatprep.subr.mxu0 0.0
    %1471 = vmatpush2.msra.mxu0 0.0
    %1472 = vmatprep.subr.mxu0 0.0
    %1473 = vmatpush2.msra.mxu0 0.0
    %1474 = vmatprep.subr.mxu0 0.0
    %1475 = vmatpush2.msra.mxu0 0.0
    %1476 = vmatprep.subr.mxu0 0.0
    %1477 = vmatpush2.msra.mxu0 0.0
    %1478 = vmatprep.subr.mxu0 0.0
    %1479 = vmatpush2.msra.mxu0 0.0
    %1480 = vmatprep.subr.mxu0 0.0
    %1481 = vmatpush2.msra.mxu0 0.0
    %1482 = vmatprep.subr.mxu0 0.0
    %1483 = vmatpush2.msra.mxu0 0.0
    %1484 = vmatprep.subr.mxu0 0.0
    %1485 = vmatpush2.msra.mxu0 0.0
    %1486 = vmatprep.subr.mxu0 0.0
    %1487 = vmatpush2.msra.mxu0 0.0
    %1488 = vmatprep.subr.mxu0 0.0
    %1489 = vmatpush2.msra.mxu0 0.0
    %1490 = vmatprep.subr.mxu0 0.0
    %1491 = vmatpush2.msra.mxu0 0.0
    %1492 = vmatprep.subr.mxu0 0.0
    %1493 = vmatpush2.msra.mxu0 0.0
    %1494 = vmatprep.subr.mxu0 0.0
    %1495 = vmatpush2.msra.mxu0 0.0
    %1496 = vmatprep.subr.mxu0 0.0
    %1497 = vmatpush2.msra.mxu0 0.0
    %1498 = vmatprep.subr.mxu0 0.0
    %1499 = vmatpush2.msra.mxu0 0.0
    %1500 = vmatprep.mubr.f32.mxu0 0.0
    %1501 = vmatmul.mubr.f32.gmra.mxu0 %v1359
    %v1502 = vpop.f32.mrf.mxu0
    %v1503 = vadd.f32 %v1363, %v1502
    %v1504 = vpop.f32.mrf.mxu0
    %v1505 = vadd.f32 %v1364, %v1504
    %1506 = vdwg.mxu0
    %v1507 = vmul.f32 %v1432, 0.5
    %v1508 = vmul.f32 %v1434, 0.5
    %v1509 = vmul.f32 %v1503, 0.5
    %v1510 = vtanh.pop %v1507
    %v1511 = vtanh.pop %v1508
    %v1512 = vtanh.pop %v1509
    %v1513 = vmul.f32 %v1510, 0.5
    %v1514 = vmul.f32 %v1511, 0.5
    %v1515 = vmul.f32 %v1512, 0.5
    %v1516 = vadd.f32 %v1513, 0.5
    %v1517 = vadd.f32 %v1514, 0.5
    %v1518 = vadd.f32 %v1515, 0.5
    %v1519 = vtanh.pop %v1505
    %v1520 = vmul.f32 %v1517, %v1357
    %v1521 = vmul.f32 %v1516, %v1519
    %v1522 = vadd.f32 %v1520, %v1521
    %v1523 = vtanh.pop %v1522
    %v1524 = vmul.f32 %v1518, %v1523
    %v1525 = vld [vmem:[%s3] sm:$0xf]
    %v1527 = vlaneseq
    %v1528 = vshrl.u32 %v1527, 7
    %v1529 = vsub.s32 0, %v1528
    %v1530 = vrot.slane %v1525, %v1529
    %v1531 = vlaneseq
    %v1532 = vshrl.u32 %v1531, 7
    %v1533 = vsub.s32 1, %v1532
    %v1534 = vrot.slane %v1525, %v1533
    %v1535 = vlaneseq
    %v1536 = vshrl.u32 %v1535, 7
    %v1537 = vsub.s32 2, %v1536
    %v1538 = vrot.slane %v1525, %v1537
    %v1539 = vlaneseq
    %v1540 = vshrl.u32 %v1539, 7
    %v1541 = vsub.s32 3, %v1540
    %v1542 = vrot.slane %v1525, %v1541
    %1547 = vmatprep.subr.mxu0 %v372
    %1548 = vmatpush1.msra.mxu0 %v371
    %1549 = vmatprep.subr.mxu0 %v368
    %1550 = vmatpush1.msra.mxu0 %v367
    %1551 = vmatprep.subr.mxu0 %v364
    %1552 = vmatpush1.msra.mxu0 %v363
    %1553 = vmatprep.subr.mxu0 %v360
    %1554 = vmatpush1.msra.mxu0 %v359
    %1555 = vmatprep.subr.mxu0 %v356
    %1556 = vmatpush1.msra.mxu0 %v355
    %1557 = vmatprep.subr.mxu0 %v352
    %1558 = vmatpush1.msra.mxu0 %v351
    %1559 = vmatprep.subr.mxu0 %v348
    %1560 = vmatpush1.msra.mxu0 %v347
    %1561 = vmatprep.subr.mxu0 %v344
    %1562 = vmatpush1.msra.mxu0 %v343
    %1563 = vmatprep.subr.mxu0 %v340
    %1564 = vmatpush1.msra.mxu0 %v339
    %1565 = vmatprep.subr.mxu0 %v336
    %1566 = vmatpush1.msra.mxu0 %v335
    %1567 = vmatprep.subr.mxu0 %v332
    %1568 = vmatpush1.msra.mxu0 %v331
    %1569 = vmatprep.subr.mxu0 %v328
    %1570 = vmatpush1.msra.mxu0 %v327
    %1571 = vmatprep.subr.mxu0 %v324
    %1572 = vmatpush1.msra.mxu0 %v323
    %1573 = vmatprep.subr.mxu0 %v320
    %1574 = vmatpush1.msra.mxu0 %v319
    %1575 = vmatprep.subr.mxu0 %v316
    %1576 = vmatpush1.msra.mxu0 %v315
    %1577 = vmatprep.subr.mxu0 %v312
    %1578 = vmatpush1.msra.mxu0 %v311
    %1579 = vmatprep.subr.mxu0 0.0
    %1580 = vmatpush2.msra.mxu0 0.0
    %1581 = vmatprep.subr.mxu0 0.0
    %1582 = vmatpush2.msra.mxu0 0.0
    %1583 = vmatprep.subr.mxu0 0.0
    %1584 = vmatpush2.msra.mxu0 0.0
    %1585 = vmatprep.subr.mxu0 0.0
    %1586 = vmatpush2.msra.mxu0 0.0
    %1587 = vmatprep.subr.mxu0 0.0
    %1588 = vmatpush2.msra.mxu0 0.0
    %1589 = vmatprep.subr.mxu0 0.0
    %1590 = vmatpush2.msra.mxu0 0.0
    %1591 = vmatprep.subr.mxu0 0.0
    %1592 = vmatpush2.msra.mxu0 0.0
    %1593 = vmatprep.subr.mxu0 0.0
    %1594 = vmatpush2.msra.mxu0 0.0
    %1595 = vmatprep.subr.mxu0 0.0
    %1596 = vmatpush2.msra.mxu0 0.0
    %1597 = vmatprep.subr.mxu0 0.0
    %1598 = vmatpush2.msra.mxu0 0.0
    %1599 = vmatprep.subr.mxu0 0.0
    %1600 = vmatpush2.msra.mxu0 0.0
    %1601 = vmatprep.subr.mxu0 0.0
    %1602 = vmatpush2.msra.mxu0 0.0
    %1603 = vmatprep.subr.mxu0 0.0
    %1604 = vmatpush2.msra.mxu0 0.0
    %1605 = vmatprep.subr.mxu0 0.0
    %1606 = vmatpush2.msra.mxu0 0.0
    %1607 = vmatprep.subr.mxu0 0.0
    %1608 = vmatpush2.msra.mxu0 0.0
    %1609 = vmatprep.subr.mxu0 0.0
    %1610 = vmatpush2.msra.mxu0 0.0
    %1611 = vmatprep.mubr.f32.mxu0 0.0
    %1612 = vmatmul.mubr.f32.gmra.mxu0 %v1524
    %v1613 = vpop.f32.mrf.mxu0
    %v1614 = vadd.f32 %v1530, %v1613
    %v1615 = vpop.f32.mrf.mxu0
    %v1616 = vadd.f32 %v1534, %v1615
    %1617 = vdwg.mxu0
    %1618 = vmatprep.subr.mxu0 %v374
    %1619 = vmatpush1.msra.mxu0 %v373
    %1620 = vmatprep.subr.mxu0 %v370
    %1621 = vmatpush1.msra.mxu0 %v369
    %1622 = vmatprep.subr.mxu0 %v366
    %1623 = vmatpush1.msra.mxu0 %v365
    %1624 = vmatprep.subr.mxu0 %v362
    %1625 = vmatpush1.msra.mxu0 %v361
    %1626 = vmatprep.subr.mxu0 %v358
    %1627 = vmatpush1.msra.mxu0 %v357
    %1628 = vmatprep.subr.mxu0 %v354
    %1629 = vmatpush1.msra.mxu0 %v353
    %1630 = vmatprep.subr.mxu0 %v350
    %1631 = vmatpush1.msra.mxu0 %v349
    %1632 = vmatprep.subr.mxu0 %v346
    %1633 = vmatpush1.msra.mxu0 %v345
    %1634 = vmatprep.subr.mxu0 %v342
    %1635 = vmatpush1.msra.mxu0 %v341
    %1636 = vmatprep.subr.mxu0 %v338
    %1637 = vmatpush1.msra.mxu0 %v337
    %1638 = vmatprep.subr.mxu0 %v334
    %1639 = vmatpush1.msra.mxu0 %v333
    %1640 = vmatprep.subr.mxu0 %v330
    %1641 = vmatpush1.msra.mxu0 %v329
    %1642 = vmatprep.subr.mxu0 %v326
    %1643 = vmatpush1.msra.mxu0 %v325
    %1644 = vmatprep.subr.mxu0 %v322
    %1645 = vmatpush1.msra.mxu0 %v321
    %1646 = vmatprep.subr.mxu0 %v318
    %1647 = vmatpush1.msra.mxu0 %v317
    %1648 = vmatprep.subr.mxu0 %v314
    %1649 = vmatpush1.msra.mxu0 %v313
    %1650 = vmatprep.subr.mxu0 0.0
    %1651 = vmatpush2.msra.mxu0 0.0
    %1652 = vmatprep.subr.mxu0 0.0
    %1653 = vmatpush2.msra.mxu0 0.0
    %1654 = vmatprep.subr.mxu0 0.0
    %1655 = vmatpush2.msra.mxu0 0.0
    %1656 = vmatprep.subr.mxu0 0.0
    %1657 = vmatpush2.msra.mxu0 0.0
    %1658 = vmatprep.subr.mxu0 0.0
    %1659 = vmatpush2.msra.mxu0 0.0
    %1660 = vmatprep.subr.mxu0 0.0
    %1661 = vmatpush2.msra.mxu0 0.0
    %1662 = vmatprep.subr.mxu0 0.0
    %1663 = vmatpush2.msra.mxu0 0.0
    %1664 = vmatprep.subr.mxu0 0.0
    %1665 = vmatpush2.msra.mxu0 0.0
    %1666 = vmatprep.subr.mxu0 0.0
    %1667 = vmatpush2.msra.mxu0 0.0
    %1668 = vmatprep.subr.mxu0 0.0
    %1669 = vmatpush2.msra.mxu0 0.0
    %1670 = vmatprep.subr.mxu0 0.0
    %1671 = vmatpush2.msra.mxu0 0.0
    %1672 = vmatprep.subr.mxu0 0.0
    %1673 = vmatpush2.msra.mxu0 0.0
    %1674 = vmatprep.subr.mxu0 0.0
    %1675 = vmatpush2.msra.mxu0 0.0
    %1676 = vmatprep.subr.mxu0 0.0
    %1677 = vmatpush2.msra.mxu0 0.0
    %1678 = vmatprep.subr.mxu0 0.0
    %1679 = vmatpush2.msra.mxu0 0.0
    %1680 = vmatprep.subr.mxu0 0.0
    %1681 = vmatpush2.msra.mxu0 0.0
    %1682 = vmatprep.mubr.f32.mxu0 0.0
    %1683 = vmatmul.mubr.f32.gmra.mxu0 %v1524
    %v1684 = vpop.f32.mrf.mxu0
    %v1685 = vadd.f32 %v1538, %v1684
    %v1686 = vpop.f32.mrf.mxu0
    %v1687 = vadd.f32 %v1542, %v1686
    %1688 = vdwg.mxu0
    %v1689 = vmul.f32 %v1614, 0.5
    %v1690 = vmul.f32 %v1616, 0.5
    %v1691 = vmul.f32 %v1685, 0.5
    %v1692 = vtanh.pop %v1689
    %v1693 = vtanh.pop %v1690
    %v1694 = vtanh.pop %v1691
    %v1695 = vmul.f32 %v1692, 0.5
    %v1696 = vmul.f32 %v1693, 0.5
    %v1697 = vmul.f32 %v1694, 0.5
    %v1698 = vadd.f32 %v1695, 0.5
    %v1699 = vadd.f32 %v1696, 0.5
    %v1700 = vadd.f32 %v1697, 0.5
    %v1701 = vtanh.pop %v1687
    %v1702 = vmul.f32 %v1699, %v1522
    %v1703 = vmul.f32 %v1698, %v1701
    %v1704 = vadd.f32 %v1702, %v1703
    %v1705 = vtanh.pop %v1704
    %v1706 = vmul.f32 %v1700, %v1705
    %v1707 = vld [vmem:[%s5] sm:$0x1]
    %v1709 = vlaneseq
    %v1710 = vshrl.u32 %v1709, 7
    %v1711 = vsub.s32 0, %v1710
    %v1712 = vrot.slane %v1707, %v1711
    %v1714 = vmul.f32 %v1706, %v1712
    %1715 = vadd.xlane.f32.xlu0 %v1714
    %v1716 = vpop.xlane.xlu0 %1715
    %v1717 = vld [vmem:[#allocation3] sm:$0x1]
    %v1719 = vlaneseq
    %v1720 = vshrl.u32 %v1719, 7
    %v1721 = vsub.s32 0, %v1720
    %v1722 = vrot.slane %v1717, %v1721
    %v1724 = vadd.f32 %v1716, %v1722
    %vm1725 = vcmask 7168
    %1726 = vst.msk [vmem:[%s7] sm:$0xff] %vm1725, %v1724
    // Predicated region
    $region34: #{tpu_custom_call.1} parent=1 // pred_check
      _
    $region35: #{tpu_custom_call.1} parent=1 // pred_check_branch
      %1728 = sbr.rel (0) target = $region37
    $region36: #{tpu_custom_call.1} parent=1 // pred_region
      _
    $region37: #{tpu_custom_call.1} parent=1 // pred_fallthru
      _
    // Predicated region
    $region38: #{tpu_custom_call.1} parent=1 // pred_check
      _
    $region39: #{tpu_custom_call.1} parent=1 // pred_check_branch
      %1730 = sbr.rel (0) target = $region41
    $region40: #{tpu_custom_call.1} parent=1 // pred_region
      _
    $region41: #{tpu_custom_call.1} parent=1 // pred_fallthru
      _
    %1731 = vsyncpa [#allocation5], 1

</llo_original>
